<compile_context>
chip_gen: v7x
topology: tpu7x:2x2x1
jax: 0.10.0
libtpu: 0.0.40
codegen_flags: <defaults>
</compile_context>

<pallas_src>
import numpy as np
import jax
import jax.numpy as jnp
from jax import lax
from jax.experimental import pallas as pl
from jax.experimental.pallas import tpu as pltpu

BN_EPS = 1e-5
LN_EPS = 1e-5
NUM_LAYERS = 2  # nn.TransformerEncoder(num_layers=2)


def _layernorm(v, w, b):
    mu = jnp.mean(v, axis=-1, keepdims=True)
    d = v - mu
    var = jnp.mean(d * d, axis=-1, keepdims=True)
    return d * lax.rsqrt(var + LN_EPS) * w + b


def make_kernel(hidden_dim, out_dim, num_layers):
    H = hidden_dim
    OUT = out_dim

    def kernel(cb_ref,            # SMEM (2, 8): conv/bn scalars
               x_ref,             # (B, D_in) f32
               fc0_w_ref,         # (D_in, H) bf16
               gvec_ref,          # (2, max(H, OUT)) f32: [fc0_b | fc_out_b]
               wv_ref, wo_ref,    # (1, H, H) bf16 (per-layer block)
               vecs_ref,          # (1, 7, H) f32: bv, bo, b2, ln1w, ln1b, ln2w, ln2b
               w1_ref,            # (1, H, F) bf16
               b1_ref,            # (1, 1, F) f32
               w2_ref,            # (1, F, H) bf16
               fco_w_ref,         # (H, OUT) bf16
               out_ref,           # (B, OUT) f32
               h_sc):             # VMEM scratch (B, H) f32 -- carried across grid steps
        l = pl.program_id(0)

        # ---- prologue: fc0 + ResNetBlock(1, 1), only on the first grid step ----
        @pl.when(l == 0)
        def _prologue():
            x = x_ref[...]
            h = jnp.dot(x.astype(jnp.bfloat16), fc0_w_ref[...],
                        preferred_element_type=jnp.float32) + gvec_ref[0, :H]

            # edge masks computed once, reused by both conv+bn stages
            idx = lax.broadcasted_iota(jnp.int32, h.shape, 1)
            left_edge = idx == 0
            right_edge = idx == H - 1

            def conv_bn(v, row):
                # Conv1d(1, 1, kernel_size=3, padding=1) along features, then
                # BatchNorm1d(1) in eval mode (running stats).
                c0 = cb_ref[row, 0]
                c1 = cb_ref[row, 1]
                c2 = cb_ref[row, 2]
                bias = cb_ref[row, 3]
                gamma = cb_ref[row, 4]
                beta = cb_ref[row, 5]
                mean = cb_ref[row, 6]
                var = cb_ref[row, 7]
                # shifted copies with zero padding at the boundaries
                # (XLU roll + mask; pltpu.roll requires non-negative shifts)
                xl = jnp.where(left_edge, 0.0, pltpu.roll(v, shift=1, axis=1))
                xr = jnp.where(right_edge, 0.0, pltpu.roll(v, shift=H - 1, axis=1))
                y = c0 * xl + c1 * v + c2 * xr + bias
                return gamma * (y - mean) * lax.rsqrt(var + BN_EPS) + beta

            r = h
            h = jnp.maximum(conv_bn(h, 0), 0.0)
            h = conv_bn(h, 1)
            h_sc[...] = jnp.maximum(h + r, 0.0)

        # ---- transformer encoder layer l (post-norm, seq_len == 1, dropout = id) ----
        h = h_sc[...]
        vecs = vecs_ref[0]                                   # (7, H) f32
        # attention collapses to out_proj(V) because softmax over 1 key == 1
        v = jnp.dot(h.astype(jnp.bfloat16), wv_ref[0],
                    preferred_element_type=jnp.float32) + vecs[0]
        sa = jnp.dot(v.astype(jnp.bfloat16), wo_ref[0],
                     preferred_element_type=jnp.float32) + vecs[1]
        h = _layernorm(h + sa, vecs[3], vecs[4])
        ff = jnp.maximum(
            jnp.dot(h.astype(jnp.bfloat16), w1_ref[0],
                    preferred_element_type=jnp.float32) + b1_ref[0], 0.0)
        ff = jnp.dot(ff.astype(jnp.bfloat16), w2_ref[0],
                     preferred_element_type=jnp.float32) + vecs[2]
        h = _layernorm(h + ff, vecs[5], vecs[6])
        h_sc[...] = h

        # ---- epilogue: fc_out on the last grid step ----
        @pl.when(l == num_layers - 1)
        def _epilogue():
            out_ref[...] = (jnp.dot(h_sc[...].astype(jnp.bfloat16), fco_w_ref[...],
                                    preferred_element_type=jnp.float32)
                            + gvec_ref[1, :OUT])

    return kernel


def resnet_transformer_forward(x, kp):
    B, D_in = x.shape
    H = kp["fc0_w"].shape[1]
    F = kp["w1"].shape[2]
    OUT = kp["fc_out_w"].shape[1]
    GV = kp["gvec"].shape[1]

    kernel = make_kernel(H, OUT, NUM_LAYERS)

    grid_spec = pltpu.PrefetchScalarGridSpec(
        num_scalar_prefetch=0,
        grid=(NUM_LAYERS,),
        in_specs=[
            pl.BlockSpec(memory_space=pltpu.MemorySpace.SMEM),   # cb scalars
            pl.BlockSpec((B, D_in), lambda l: (0, 0)),           # x
            pl.BlockSpec((D_in, H), lambda l: (0, 0)),           # fc0_w (bf16)
            pl.BlockSpec((2, GV), lambda l: (0, 0)),             # packed global biases
            pl.BlockSpec((1, H, H), lambda l: (l, 0, 0)),        # wv  (bf16, per layer)
            pl.BlockSpec((1, H, H), lambda l: (l, 0, 0)),        # wo  (bf16, per layer)
            pl.BlockSpec((1, 7, H), lambda l: (l, 0, 0)),        # packed per-layer vectors
            pl.BlockSpec((1, H, F), lambda l: (l, 0, 0)),        # w1  (bf16, per layer)
            pl.BlockSpec((1, 1, F), lambda l: (l, 0, 0)),        # b1
            pl.BlockSpec((1, F, H), lambda l: (l, 0, 0)),        # w2  (bf16, per layer)
            pl.BlockSpec((H, OUT), lambda l: (0, 0)),            # fc_out_w (bf16)
        ],
        out_specs=pl.BlockSpec((B, OUT), lambda l: (0, 0)),
        scratch_shapes=[pltpu.VMEM((B, H), jnp.float32)],
    )

    return pl.pallas_call(
        kernel,
        out_shape=jax.ShapeDtypeStruct((B, OUT), jnp.float32),
        grid_spec=grid_spec,
        compiler_params=pltpu.CompilerParams(dimension_semantics=("arbitrary",)),
    )(kp["cb"], x, kp["fc0_w"], kp["gvec"],
      kp["wv"], kp["wo"], kp["vecs"], kp["w1"], kp["b1"], kp["w2"],
      kp["fc_out_w"])


def init_params(key, input_dim, hidden_dim, ffn_dim, output_dim):
    """Full-precision parameters (mirrors fresh PyTorch init), used by the reference."""
    ks = jax.random.split(key, 4 + 4 * NUM_LAYERS)
    ki = iter(ks)

    def lin(k, fan_in, fan_out):
        # PyTorch nn.Linear default init; weights stored pre-transposed as (in, out).
        bound = 1.0 / np.sqrt(fan_in)
        kw, kb = jax.random.split(k)
        w = jax.random.uniform(kw, (fan_in, fan_out), jnp.float32, -bound, bound)
        b = jax.random.uniform(kb, (fan_out,), jnp.float32, -bound, bound)
        return w, b

    p = {}
    p["fc0_w"], p["fc0_b"] = lin(next(ki), input_dim, hidden_dim)

    # conv1/bn1 and conv2/bn2 packed per row:
    # [w0, w1, w2, conv_bias, bn_gamma, bn_beta, bn_running_mean, bn_running_var]
    conv_bound = 1.0 / np.sqrt(1 * 3)
    cb_rows = []
    for _ in range(2):
        cw = jax.random.uniform(next(ki), (4,), jnp.float32, -conv_bound, conv_bound)
        cb_rows.append(jnp.concatenate([cw, jnp.array([1.0, 0.0, 0.0, 1.0], jnp.float32)]))
    p["cb"] = jnp.stack(cb_rows)  # (2, 8)

    acc = {k: [] for k in ("wv", "bv", "wo", "bo", "w1", "b1", "w2", "b2",
                           "ln1w", "ln1b", "ln2w", "ln2b")}
    for _ in range(NUM_LAYERS):
        w, b = lin(next(ki), hidden_dim, hidden_dim); acc["wv"].append(w); acc["bv"].append(b)
        w, b = lin(next(ki), hidden_dim, hidden_dim); acc["wo"].append(w); acc["bo"].append(b)
        w, b = lin(next(ki), hidden_dim, ffn_dim);    acc["w1"].append(w); acc["b1"].append(b)
        w, b = lin(next(ki), ffn_dim, hidden_dim);    acc["w2"].append(w); acc["b2"].append(b)
        acc["ln1w"].append(jnp.ones((hidden_dim,), jnp.float32))
        acc["ln1b"].append(jnp.zeros((hidden_dim,), jnp.float32))
        acc["ln2w"].append(jnp.ones((hidden_dim,), jnp.float32))
        acc["ln2b"].append(jnp.zeros((hidden_dim,), jnp.float32))
    for k, v in acc.items():
        p[k] = jnp.stack(v)  # leading dim = NUM_LAYERS

    p["fc_out_w"], p["fc_out_b"] = lin(next(ki), hidden_dim, output_dim)
    return p


def pack_params(p):
    """Build the kernel-side parameter dict: bf16 weights + consolidated vectors."""
    H = p["fc0_w"].shape[1]
    OUT = p["fc_out_w"].shape[1]
    gv = max(H, OUT)
    gvec = jnp.zeros((2, gv), jnp.float32)
    gvec = gvec.at[0, :H].set(p["fc0_b"]).at[1, :OUT].set(p["fc_out_b"])
    # per-layer packed vectors: rows = [bv, bo, b2, ln1w, ln1b, ln2w, ln2b]
    vecs = jnp.stack([p["bv"], p["bo"], p["b2"],
                      p["ln1w"], p["ln1b"], p["ln2w"], p["ln2b"]], axis=1)  # (L, 7, H)
    return {
        "cb": p["cb"],
        "gvec": gvec,
        "vecs": vecs,
        "b1": p["b1"][:, None, :],                          # (L, 1, F)
        "fc0_w": p["fc0_w"].astype(jnp.bfloat16),
        "wv": p["wv"].astype(jnp.bfloat16),
        "wo": p["wo"].astype(jnp.bfloat16),
        "w1": p["w1"].astype(jnp.bfloat16),
        "w2": p["w2"].astype(jnp.bfloat16),
        "fc_out_w": p["fc_out_w"].astype(jnp.bfloat16),
    }


def reference_forward(x, p):
    # Pure-JAX f32 reference mirroring the PyTorch forward (eval mode).
    h = x @ p["fc0_w"] + p["fc0_b"]

    def conv_bn(v, row):
        w = p["cb"][row]
        padded = jnp.pad(v, ((0, 0), (1, 1)))
        y = w[0] * padded[:, :-2] + w[1] * padded[:, 1:-1] + w[2] * padded[:, 2:] + w[3]
        return w[4] * (y - w[6]) / jnp.sqrt(w[7] + BN_EPS) + w[5]

    r = h
    h = jnp.maximum(conv_bn(h, 0), 0.0)
    h = conv_bn(h, 1)
    h = jnp.maximum(h + r, 0.0)

    def ln(v, w, b):
        mu = v.mean(-1, keepdims=True)
        var = ((v - mu) ** 2).mean(-1, keepdims=True)
        return (v - mu) / jnp.sqrt(var + LN_EPS) * w + b

    for l in range(NUM_LAYERS):
        v = h @ p["wv"][l] + p["bv"][l]
        sa = v @ p["wo"][l] + p["bo"][l]
        h = ln(h + sa, p["ln1w"][l], p["ln1b"][l])
        ff = jnp.maximum(h @ p["w1"][l] + p["b1"][l], 0.0)
        ff = ff @ p["w2"][l] + p["b2"][l]
        h = ln(h + ff, p["ln2w"][l], p["ln2b"][l])
    return h @ p["fc_out_w"] + p["fc_out_b"]


if __name__ == "__main__":
    INPUT_DIM, HIDDEN_DIM, OUTPUT_DIM = 16, 32, 8
    FFN_DIM = 2048  # nn.TransformerEncoderLayer default dim_feedforward
    BATCH = 2       # seq_len == 1 by construction of the module's forward

    key = jax.random.PRNGKey(0)
    kx, kp = jax.random.split(key)
    x = jax.random.normal(kx, (BATCH, INPUT_DIM), dtype=jnp.float32)
    params = init_params(kp, INPUT_DIM, HIDDEN_DIM, FFN_DIM, OUTPUT_DIM)
    kernel_params = pack_params(params)

    out = resnet_transformer_forward(x, kernel_params)
    out = jax.block_until_ready(out)

    ref = reference_forward(x, params)
    # Loosened atol vs the pure-f32 reference because the kernel runs its matmuls
    # on bf16 weights/operands (f32 accumulation), per the performance review.
    np.testing.assert_allclose(np.asarray(out), np.asarray(ref), rtol=5e-2, atol=1e-1)
    print("KERNEL_OK")
</pallas_src>

<mosaic_0001>
module attributes {stable_mosaic.version = 11 : i64} {
  func.func @kernel(%arg0: i32, %arg1: memref<2x8xf32, #tpu.memory_space<smem>>, %arg2: memref<2x16xf32, #tpu.memory_space<vmem>>, %arg3: memref<16x32xbf16, #tpu.memory_space<vmem>>, %arg4: memref<2x32xf32, #tpu.memory_space<vmem>>, %arg5: memref<1x32x32xbf16, #tpu.memory_space<vmem>>, %arg6: memref<1x32x32xbf16, #tpu.memory_space<vmem>>, %arg7: memref<1x7x32xf32, #tpu.memory_space<vmem>>, %arg8: memref<1x32x2048xbf16, #tpu.memory_space<vmem>>, %arg9: memref<1x1x2048xf32, #tpu.memory_space<vmem>>, %arg10: memref<1x2048x32xbf16, #tpu.memory_space<vmem>>, %arg11: memref<32x8xbf16, #tpu.memory_space<vmem>>, %arg12: memref<2x8xf32, #tpu.memory_space<vmem>>, %arg13: memref<2x32xf32, #tpu.memory_space<vmem>>) attributes {dimension_semantics = [#tpu.dimension_semantics<arbitrary>], iteration_bounds = array<i64: 2>, scalar_prefetch = 0 : i64, scratch_operands = 1 : i64, tpu.core_type = #tpu.core_type<tc>, window_params = [{transform_indices = @transform_0, window_bounds = array<i64: 2, 8>}, {pipeline_mode = #tpu.pipeline_mode<synchronous>, transform_indices = @transform_1, window_bounds = array<i64: 2, 16>}, {pipeline_mode = #tpu.pipeline_mode<synchronous>, transform_indices = @transform_2, window_bounds = array<i64: 16, 32>}, {pipeline_mode = #tpu.pipeline_mode<synchronous>, transform_indices = @transform_3, window_bounds = array<i64: 2, 32>}, {transform_indices = @transform_4, window_bounds = array<i64: 1, 32, 32>}, {transform_indices = @transform_5, window_bounds = array<i64: 1, 32, 32>}, {transform_indices = @transform_6, window_bounds = array<i64: 1, 7, 32>}, {transform_indices = @transform_7, window_bounds = array<i64: 1, 32, 2048>}, {transform_indices = @transform_8, window_bounds = array<i64: 1, 1, 2048>}, {transform_indices = @transform_9, window_bounds = array<i64: 1, 2048, 32>}, {pipeline_mode = #tpu.pipeline_mode<synchronous>, transform_indices = @transform_10, window_bounds = array<i64: 32, 8>}, {pipeline_mode = #tpu.pipeline_mode<synchronous>, transform_indices = @transform_11, window_bounds = array<i64: 2, 8>}]} {
    %c0_i32 = arith.constant 0 : i32
    %0 = arith.cmpi eq, %arg0, %c0_i32 : i32
    %1 = arith.extui %0 : i1 to i32
    %c0_i32_0 = arith.constant 0 : i32
    %2 = arith.cmpi ne, %1, %c0_i32_0 : i32
    scf.if %2 {
      %c0_37 = arith.constant 0 : index
      %c0_38 = arith.constant 0 : index
      %101 = vector.load %arg2[%c0_37, %c0_38] : memref<2x16xf32, #tpu.memory_space<vmem>>, vector<2x16xf32>
      %102 = arith.truncf %101 : vector<2x16xf32> to vector<2x16xbf16>
      %c0_39 = arith.constant 0 : index
      %c0_40 = arith.constant 0 : index
      %103 = vector.load %arg3[%c0_39, %c0_40] : memref<16x32xbf16, #tpu.memory_space<vmem>>, vector<16x32xbf16>
      %cst_41 = arith.constant dense<0.000000e+00> : vector<2x32xf32>
      %104 = tpu.matmul %102, %103, %cst_41 {dimension_numbers = #tpu.dot_dimension_numbers<[1], [0], [0], [1], [0, 0, 1, 1], [], []>} : vector<2x16xbf16>, vector<16x32xbf16>, vector<2x32xf32> -> vector<2x32xf32>
      %c0_42 = arith.constant 0 : index
      %c0_43 = arith.constant 0 : index
      %105 = vector.load %arg4[%c0_42, %c0_43] : memref<2x32xf32, #tpu.memory_space<vmem>>, vector<1x32xf32>
      %106 = vector.shape_cast %105 : vector<1x32xf32> to vector<32xf32>
      %107 = vector.shape_cast %106 : vector<32xf32> to vector<1x32xf32>
      %108 = vector.broadcast %107 : vector<1x32xf32> to vector<2x32xf32>
      %109 = arith.addf %104, %108 : vector<2x32xf32>
      %110 = tpu.iota {dimensions = array<i32: 1>} : vector<2x32xi32>
      %c0_i32_44 = arith.constant 0 : i32
      %111 = vector.broadcast %c0_i32_44 : i32 to vector<2x32xi32>
      %112 = arith.cmpi eq, %110, %111 : vector<2x32xi32>
      %c31_i32 = arith.constant 31 : i32
      %113 = vector.broadcast %c31_i32 : i32 to vector<2x32xi32>
      %114 = arith.cmpi eq, %110, %113 : vector<2x32xi32>
      %c0_45 = arith.constant 0 : index
      %c0_46 = arith.constant 0 : index
      %115 = memref.load %arg1[%c0_45, %c0_46] : memref<2x8xf32, #tpu.memory_space<smem>>
      %c0_47 = arith.constant 0 : index
      %c1 = arith.constant 1 : index
      %116 = memref.load %arg1[%c0_47, %c1] : memref<2x8xf32, #tpu.memory_space<smem>>
      %c0_48 = arith.constant 0 : index
      %c2 = arith.constant 2 : index
      %117 = memref.load %arg1[%c0_48, %c2] : memref<2x8xf32, #tpu.memory_space<smem>>
      %c0_49 = arith.constant 0 : index
      %c3 = arith.constant 3 : index
      %118 = memref.load %arg1[%c0_49, %c3] : memref<2x8xf32, #tpu.memory_space<smem>>
      %c0_50 = arith.constant 0 : index
      %c4 = arith.constant 4 : index
      %119 = memref.load %arg1[%c0_50, %c4] : memref<2x8xf32, #tpu.memory_space<smem>>
      %c0_51 = arith.constant 0 : index
      %c5 = arith.constant 5 : index
      %120 = memref.load %arg1[%c0_51, %c5] : memref<2x8xf32, #tpu.memory_space<smem>>
      %c0_52 = arith.constant 0 : index
      %c6 = arith.constant 6 : index
      %121 = memref.load %arg1[%c0_52, %c6] : memref<2x8xf32, #tpu.memory_space<smem>>
      %c0_53 = arith.constant 0 : index
      %c7 = arith.constant 7 : index
      %122 = memref.load %arg1[%c0_53, %c7] : memref<2x8xf32, #tpu.memory_space<smem>>
      %c1_i32_54 = arith.constant 1 : i32
      %123 = tpu.dynamic_rotate %109 by %c1_i32_54 dim 1 : vector<2x32xf32>, i32 -> vector<2x32xf32>
      %cst_55 = arith.constant 0.000000e+00 : f32
      %124 = vector.broadcast %cst_55 : f32 to vector<2x32xf32>
      %125 = arith.select %112, %124, %123 : vector<2x32xi1>, vector<2x32xf32>
      %c31_i32_56 = arith.constant 31 : i32
      %126 = tpu.dynamic_rotate %109 by %c31_i32_56 dim 1 : vector<2x32xf32>, i32 -> vector<2x32xf32>
      %cst_57 = arith.constant 0.000000e+00 : f32
      %127 = vector.broadcast %cst_57 : f32 to vector<2x32xf32>
      %128 = arith.select %114, %127, %126 : vector<2x32xi1>, vector<2x32xf32>
      %129 = vector.broadcast %115 : f32 to vector<2x32xf32>
      %130 = arith.mulf %129, %125 : vector<2x32xf32>
      %131 = vector.broadcast %116 : f32 to vector<2x32xf32>
      %132 = arith.mulf %131, %109 : vector<2x32xf32>
      %133 = arith.addf %130, %132 : vector<2x32xf32>
      %134 = vector.broadcast %117 : f32 to vector<2x32xf32>
      %135 = arith.mulf %134, %128 : vector<2x32xf32>
      %136 = arith.addf %133, %135 : vector<2x32xf32>
      %137 = vector.broadcast %118 : f32 to vector<2x32xf32>
      %138 = arith.addf %136, %137 : vector<2x32xf32>
      %139 = vector.broadcast %121 : f32 to vector<2x32xf32>
      %140 = arith.subf %138, %139 : vector<2x32xf32>
      %141 = vector.broadcast %119 : f32 to vector<2x32xf32>
      %142 = arith.mulf %141, %140 : vector<2x32xf32>
      %cst_58 = arith.constant 9.99999974E-6 : f32
      %143 = arith.addf %122, %cst_58 : f32
      %144 = math.rsqrt %143 : f32
      %145 = vector.broadcast %144 : f32 to vector<2x32xf32>
      %146 = arith.mulf %142, %145 : vector<2x32xf32>
      %147 = vector.broadcast %120 : f32 to vector<2x32xf32>
      %148 = arith.addf %146, %147 : vector<2x32xf32>
      %cst_59 = arith.constant 0.000000e+00 : f32
      %149 = vector.broadcast %cst_59 : f32 to vector<2x32xf32>
      %150 = arith.maximumf %148, %149 : vector<2x32xf32>
      %c1_60 = arith.constant 1 : index
      %c0_61 = arith.constant 0 : index
      %151 = memref.load %arg1[%c1_60, %c0_61] : memref<2x8xf32, #tpu.memory_space<smem>>
      %c1_62 = arith.constant 1 : index
      %c1_63 = arith.constant 1 : index
      %152 = memref.load %arg1[%c1_62, %c1_63] : memref<2x8xf32, #tpu.memory_space<smem>>
      %c1_64 = arith.constant 1 : index
      %c2_65 = arith.constant 2 : index
      %153 = memref.load %arg1[%c1_64, %c2_65] : memref<2x8xf32, #tpu.memory_space<smem>>
      %c1_66 = arith.constant 1 : index
      %c3_67 = arith.constant 3 : index
      %154 = memref.load %arg1[%c1_66, %c3_67] : memref<2x8xf32, #tpu.memory_space<smem>>
      %c1_68 = arith.constant 1 : index
      %c4_69 = arith.constant 4 : index
      %155 = memref.load %arg1[%c1_68, %c4_69] : memref<2x8xf32, #tpu.memory_space<smem>>
      %c1_70 = arith.constant 1 : index
      %c5_71 = arith.constant 5 : index
      %156 = memref.load %arg1[%c1_70, %c5_71] : memref<2x8xf32, #tpu.memory_space<smem>>
      %c1_72 = arith.constant 1 : index
      %c6_73 = arith.constant 6 : index
      %157 = memref.load %arg1[%c1_72, %c6_73] : memref<2x8xf32, #tpu.memory_space<smem>>
      %c1_74 = arith.constant 1 : index
      %c7_75 = arith.constant 7 : index
      %158 = memref.load %arg1[%c1_74, %c7_75] : memref<2x8xf32, #tpu.memory_space<smem>>
      %c1_i32_76 = arith.constant 1 : i32
      %159 = tpu.dynamic_rotate %150 by %c1_i32_76 dim 1 : vector<2x32xf32>, i32 -> vector<2x32xf32>
      %cst_77 = arith.constant 0.000000e+00 : f32
      %160 = vector.broadcast %cst_77 : f32 to vector<2x32xf32>
      %161 = arith.select %112, %160, %159 : vector<2x32xi1>, vector<2x32xf32>
      %c31_i32_78 = arith.constant 31 : i32
      %162 = tpu.dynamic_rotate %150 by %c31_i32_78 dim 1 : vector<2x32xf32>, i32 -> vector<2x32xf32>
      %cst_79 = arith.constant 0.000000e+00 : f32
      %163 = vector.broadcast %cst_79 : f32 to vector<2x32xf32>
      %164 = arith.select %114, %163, %162 : vector<2x32xi1>, vector<2x32xf32>
      %165 = vector.broadcast %151 : f32 to vector<2x32xf32>
      %166 = arith.mulf %165, %161 : vector<2x32xf32>
      %167 = vector.broadcast %152 : f32 to vector<2x32xf32>
      %168 = arith.mulf %167, %150 : vector<2x32xf32>
      %169 = arith.addf %166, %168 : vector<2x32xf32>
      %170 = vector.broadcast %153 : f32 to vector<2x32xf32>
      %171 = arith.mulf %170, %164 : vector<2x32xf32>
      %172 = arith.addf %169, %171 : vector<2x32xf32>
      %173 = vector.broadcast %154 : f32 to vector<2x32xf32>
      %174 = arith.addf %172, %173 : vector<2x32xf32>
      %175 = vector.broadcast %157 : f32 to vector<2x32xf32>
      %176 = arith.subf %174, %175 : vector<2x32xf32>
      %177 = vector.broadcast %155 : f32 to vector<2x32xf32>
      %178 = arith.mulf %177, %176 : vector<2x32xf32>
      %cst_80 = arith.constant 9.99999974E-6 : f32
      %179 = arith.addf %158, %cst_80 : f32
      %180 = math.rsqrt %179 : f32
      %181 = vector.broadcast %180 : f32 to vector<2x32xf32>
      %182 = arith.mulf %178, %181 : vector<2x32xf32>
      %183 = vector.broadcast %156 : f32 to vector<2x32xf32>
      %184 = arith.addf %182, %183 : vector<2x32xf32>
      %185 = arith.addf %184, %109 : vector<2x32xf32>
      %cst_81 = arith.constant 0.000000e+00 : f32
      %186 = vector.broadcast %cst_81 : f32 to vector<2x32xf32>
      %187 = arith.maximumf %185, %186 : vector<2x32xf32>
      %c0_82 = arith.constant 0 : index
      %c0_83 = arith.constant 0 : index
      %188 = vector.load %arg13[%c0_82, %c0_83] : memref<2x32xf32, #tpu.memory_space<vmem>>, vector<2x32xf32>
      tpu.vector_store %arg13[%c0_82, %c0_83], %187 {strides = array<i32>} : memref<2x32xf32, #tpu.memory_space<vmem>>, vector<2x32xf32>,
    } else {
    }
    %c0 = arith.constant 0 : index
    %c0_1 = arith.constant 0 : index
    %3 = vector.load %arg13[%c0, %c0_1] : memref<2x32xf32, #tpu.memory_space<vmem>>, vector<2x32xf32>
    %c0_2 = arith.constant 0 : index
    %c0_3 = arith.constant 0 : index
    %c0_4 = arith.constant 0 : index
    %4 = vector.load %arg7[%c0_2, %c0_3, %c0_4] : memref<1x7x32xf32, #tpu.memory_space<vmem>>, vector<1x7x32xf32>
    %5 = vector.shape_cast %4 : vector<1x7x32xf32> to vector<7x32xf32>
    %6 = arith.truncf %3 : vector<2x32xf32> to vector<2x32xbf16>
    %c0_5 = arith.constant 0 : index
    %c0_6 = arith.constant 0 : index
    %c0_7 = arith.constant 0 : index
    %7 = vector.load %arg5[%c0_5, %c0_6, %c0_7] : memref<1x32x32xbf16, #tpu.memory_space<vmem>>, vector<1x32x32xbf16>
    %8 = vector.shape_cast %7 : vector<1x32x32xbf16> to vector<32x32xbf16>
    %cst = arith.constant dense<0.000000e+00> : vector<2x32xf32>
    %9 = tpu.matmul %6, %8, %cst {dimension_numbers = #tpu.dot_dimension_numbers<[1], [0], [0], [1], [0, 0, 1, 1], [], []>} : vector<2x32xbf16>, vector<32x32xbf16>, vector<2x32xf32> -> vector<2x32xf32>
    %10 = vector.extract_strided_slice %5 {offsets = [0, 0], sizes = [1, 32], strides = [1, 1]} : vector<7x32xf32> to vector<1x32xf32>
    %11 = vector.shape_cast %10 : vector<1x32xf32> to vector<32xf32>
    %12 = vector.shape_cast %11 : vector<32xf32> to vector<1x32xf32>
    %13 = vector.broadcast %12 : vector<1x32xf32> to vector<2x32xf32>
    %14 = arith.addf %9, %13 : vector<2x32xf32>
    %15 = arith.truncf %14 : vector<2x32xf32> to vector<2x32xbf16>
    %c0_8 = arith.constant 0 : index
    %c0_9 = arith.constant 0 : index
    %c0_10 = arith.constant 0 : index
    %16 = vector.load %arg6[%c0_8, %c0_9, %c0_10] : memref<1x32x32xbf16, #tpu.memory_space<vmem>>, vector<1x32x32xbf16>
    %17 = vector.shape_cast %16 : vector<1x32x32xbf16> to vector<32x32xbf16>
    %cst_11 = arith.constant dense<0.000000e+00> : vector<2x32xf32>
    %18 = tpu.matmul %15, %17, %cst_11 {dimension_numbers = #tpu.dot_dimension_numbers<[1], [0], [0], [1], [0, 0, 1, 1], [], []>} : vector<2x32xbf16>, vector<32x32xbf16>, vector<2x32xf32> -> vector<2x32xf32>
    %19 = vector.extract_strided_slice %5 {offsets = [1, 0], sizes = [1, 32], strides = [1, 1]} : vector<7x32xf32> to vector<1x32xf32>
    %20 = vector.shape_cast %19 : vector<1x32xf32> to vector<32xf32>
    %21 = vector.shape_cast %20 : vector<32xf32> to vector<1x32xf32>
    %22 = vector.broadcast %21 : vector<1x32xf32> to vector<2x32xf32>
    %23 = arith.addf %18, %22 : vector<2x32xf32>
    %24 = arith.addf %3, %23 : vector<2x32xf32>
    %25 = vector.extract_strided_slice %5 {offsets = [3, 0], sizes = [1, 32], strides = [1, 1]} : vector<7x32xf32> to vector<1x32xf32>
    %26 = vector.shape_cast %25 : vector<1x32xf32> to vector<32xf32>
    %27 = vector.extract_strided_slice %5 {offsets = [4, 0], sizes = [1, 32], strides = [1, 1]} : vector<7x32xf32> to vector<1x32xf32>
    %28 = vector.shape_cast %27 : vector<1x32xf32> to vector<32xf32>
    %cst_12 = arith.constant dense<0.000000e+00> : vector<2xf32>
    %29 = vector.multi_reduction <add>, %24, %cst_12 [1] : vector<2x32xf32> to vector<2xf32>
    %30 = vector.shape_cast %29 : vector<2xf32> to vector<2x1xf32>
    %cst_13 = arith.constant 3.200000e+01 : f32
    %31 = vector.broadcast %cst_13 : f32 to vector<2x1xf32>
    %32 = arith.divf %30, %31 : vector<2x1xf32>
    %33 = vector.broadcast %32 : vector<2x1xf32> to vector<2x32xf32>
    %34 = arith.subf %24, %33 : vector<2x32xf32>
    %35 = arith.mulf %34, %34 : vector<2x32xf32>
    %cst_14 = arith.constant dense<0.000000e+00> : vector<2xf32>
    %36 = vector.multi_reduction <add>, %35, %cst_14 [1] : vector<2x32xf32> to vector<2xf32>
    %37 = vector.shape_cast %36 : vector<2xf32> to vector<2x1xf32>
    %cst_15 = arith.constant 3.200000e+01 : f32
    %38 = vector.broadcast %cst_15 : f32 to vector<2x1xf32>
    %39 = arith.divf %37, %38 : vector<2x1xf32>
    %cst_16 = arith.constant 9.99999974E-6 : f32
    %40 = vector.broadcast %cst_16 : f32 to vector<2x1xf32>
    %41 = arith.addf %39, %40 : vector<2x1xf32>
    %42 = math.rsqrt %41 : vector<2x1xf32>
    %43 = vector.broadcast %42 : vector<2x1xf32> to vector<2x32xf32>
    %44 = arith.mulf %34, %43 : vector<2x32xf32>
    %45 = vector.shape_cast %26 : vector<32xf32> to vector<1x32xf32>
    %46 = vector.broadcast %45 : vector<1x32xf32> to vector<2x32xf32>
    %47 = arith.mulf %44, %46 : vector<2x32xf32>
    %48 = vector.shape_cast %28 : vector<32xf32> to vector<1x32xf32>
    %49 = vector.broadcast %48 : vector<1x32xf32> to vector<2x32xf32>
    %50 = arith.addf %47, %49 : vector<2x32xf32>
    %51 = arith.truncf %50 : vector<2x32xf32> to vector<2x32xbf16>
    %c0_17 = arith.constant 0 : index
    %c0_18 = arith.constant 0 : index
    %c0_19 = arith.constant 0 : index
    %52 = vector.load %arg8[%c0_17, %c0_18, %c0_19] : memref<1x32x2048xbf16, #tpu.memory_space<vmem>>, vector<1x32x2048xbf16>
    %53 = vector.shape_cast %52 : vector<1x32x2048xbf16> to vector<32x2048xbf16>
    %cst_20 = arith.constant dense<0.000000e+00> : vector<2x2048xf32>
    %54 = tpu.matmul %51, %53, %cst_20 {dimension_numbers = #tpu.dot_dimension_numbers<[1], [0], [0], [1], [0, 0, 1, 1], [], []>} : vector<2x32xbf16>, vector<32x2048xbf16>, vector<2x2048xf32> -> vector<2x2048xf32>
    %c0_21 = arith.constant 0 : index
    %c0_22 = arith.constant 0 : index
    %c0_23 = arith.constant 0 : index
    %55 = vector.load %arg9[%c0_21, %c0_22, %c0_23] : memref<1x1x2048xf32, #tpu.memory_space<vmem>>, vector<1x1x2048xf32>
    %56 = vector.shape_cast %55 : vector<1x1x2048xf32> to vector<1x2048xf32>
    %57 = vector.broadcast %56 : vector<1x2048xf32> to vector<2x2048xf32>
    %58 = arith.addf %54, %57 : vector<2x2048xf32>
    %cst_24 = arith.constant 0.000000e+00 : f32
    %59 = vector.broadcast %cst_24 : f32 to vector<2x2048xf32>
    %60 = arith.maximumf %58, %59 : vector<2x2048xf32>
    %61 = arith.truncf %60 : vector<2x2048xf32> to vector<2x2048xbf16>
    %c0_25 = arith.constant 0 : index
    %c0_26 = arith.constant 0 : index
    %c0_27 = arith.constant 0 : index
    %62 = vector.load %arg10[%c0_25, %c0_26, %c0_27] : memref<1x2048x32xbf16, #tpu.memory_space<vmem>>, vector<1x2048x32xbf16>
    %63 = vector.shape_cast %62 : vector<1x2048x32xbf16> to vector<2048x32xbf16>
    %cst_28 = arith.constant dense<0.000000e+00> : vector<2x32xf32>
    %64 = tpu.matmul %61, %63, %cst_28 {dimension_numbers = #tpu.dot_dimension_numbers<[1], [0], [0], [1], [0, 0, 1, 1], [], []>} : vector<2x2048xbf16>, vector<2048x32xbf16>, vector<2x32xf32> -> vector<2x32xf32>
    %65 = vector.extract_strided_slice %5 {offsets = [2, 0], sizes = [1, 32], strides = [1, 1]} : vector<7x32xf32> to vector<1x32xf32>
    %66 = vector.shape_cast %65 : vector<1x32xf32> to vector<32xf32>
    %67 = vector.shape_cast %66 : vector<32xf32> to vector<1x32xf32>
    %68 = vector.broadcast %67 : vector<1x32xf32> to vector<2x32xf32>
    %69 = arith.addf %64, %68 : vector<2x32xf32>
    %70 = arith.addf %50, %69 : vector<2x32xf32>
    %71 = vector.extract_strided_slice %5 {offsets = [5, 0], sizes = [1, 32], strides = [1, 1]} : vector<7x32xf32> to vector<1x32xf32>
    %72 = vector.shape_cast %71 : vector<1x32xf32> to vector<32xf32>
    %73 = vector.extract_strided_slice %5 {offsets = [6, 0], sizes = [1, 32], strides = [1, 1]} : vector<7x32xf32> to vector<1x32xf32>
    %74 = vector.shape_cast %73 : vector<1x32xf32> to vector<32xf32>
    %cst_29 = arith.constant dense<0.000000e+00> : vector<2xf32>
    %75 = vector.multi_reduction <add>, %70, %cst_29 [1] : vector<2x32xf32> to vector<2xf32>
    %76 = vector.shape_cast %75 : vector<2xf32> to vector<2x1xf32>
    %cst_30 = arith.constant 3.200000e+01 : f32
    %77 = vector.broadcast %cst_30 : f32 to vector<2x1xf32>
    %78 = arith.divf %76, %77 : vector<2x1xf32>
    %79 = vector.broadcast %78 : vector<2x1xf32> to vector<2x32xf32>
    %80 = arith.subf %70, %79 : vector<2x32xf32>
    %81 = arith.mulf %80, %80 : vector<2x32xf32>
    %cst_31 = arith.constant dense<0.000000e+00> : vector<2xf32>
    %82 = vector.multi_reduction <add>, %81, %cst_31 [1] : vector<2x32xf32> to vector<2xf32>
    %83 = vector.shape_cast %82 : vector<2xf32> to vector<2x1xf32>
    %cst_32 = arith.constant 3.200000e+01 : f32
    %84 = vector.broadcast %cst_32 : f32 to vector<2x1xf32>
    %85 = arith.divf %83, %84 : vector<2x1xf32>
    %cst_33 = arith.constant 9.99999974E-6 : f32
    %86 = vector.broadcast %cst_33 : f32 to vector<2x1xf32>
    %87 = arith.addf %85, %86 : vector<2x1xf32>
    %88 = math.rsqrt %87 : vector<2x1xf32>
    %89 = vector.broadcast %88 : vector<2x1xf32> to vector<2x32xf32>
    %90 = arith.mulf %80, %89 : vector<2x32xf32>
    %91 = vector.shape_cast %72 : vector<32xf32> to vector<1x32xf32>
    %92 = vector.broadcast %91 : vector<1x32xf32> to vector<2x32xf32>
    %93 = arith.mulf %90, %92 : vector<2x32xf32>
    %94 = vector.shape_cast %74 : vector<32xf32> to vector<1x32xf32>
    %95 = vector.broadcast %94 : vector<1x32xf32> to vector<2x32xf32>
    %96 = arith.addf %93, %95 : vector<2x32xf32>
    %c0_34 = arith.constant 0 : index
    %c0_35 = arith.constant 0 : index
    %97 = vector.load %arg13[%c0_34, %c0_35] : memref<2x32xf32, #tpu.memory_space<vmem>>, vector<2x32xf32>
    tpu.vector_store %arg13[%c0_34, %c0_35], %96 {strides = array<i32>} : memref<2x32xf32, #tpu.memory_space<vmem>>, vector<2x32xf32>,
    %c1_i32 = arith.constant 1 : i32
    %98 = arith.cmpi eq, %arg0, %c1_i32 : i32
    %99 = arith.extui %98 : i1 to i32
    %c0_i32_36 = arith.constant 0 : i32
    %100 = arith.cmpi ne, %99, %c0_i32_36 : i32
    scf.if %100 {
      %c0_37 = arith.constant 0 : index
      %c0_38 = arith.constant 0 : index
      %101 = vector.load %arg13[%c0_37, %c0_38] : memref<2x32xf32, #tpu.memory_space<vmem>>, vector<2x32xf32>
      %102 = arith.truncf %101 : vector<2x32xf32> to vector<2x32xbf16>
      %c0_39 = arith.constant 0 : index
      %c0_40 = arith.constant 0 : index
      %103 = vector.load %arg11[%c0_39, %c0_40] : memref<32x8xbf16, #tpu.memory_space<vmem>>, vector<32x8xbf16>
      %cst_41 = arith.constant dense<0.000000e+00> : vector<2x8xf32>
      %104 = tpu.matmul %102, %103, %cst_41 {dimension_numbers = #tpu.dot_dimension_numbers<[1], [0], [0], [1], [0, 0, 1, 1], [], []>} : vector<2x32xbf16>, vector<32x8xbf16>, vector<2x8xf32> -> vector<2x8xf32>
      %c1 = arith.constant 1 : index
      %c0_42 = arith.constant 0 : index
      %105 = vector.load %arg4[%c1, %c0_42] : memref<2x32xf32, #tpu.memory_space<vmem>>, vector<1x8xf32>
      %106 = vector.shape_cast %105 : vector<1x8xf32> to vector<8xf32>
      %107 = vector.shape_cast %106 : vector<8xf32> to vector<1x8xf32>
      %108 = vector.broadcast %107 : vector<1x8xf32> to vector<2x8xf32>
      %109 = arith.addf %104, %108 : vector<2x8xf32>
      %c0_43 = arith.constant 0 : index
      %c0_44 = arith.constant 0 : index
      %110 = vector.load %arg12[%c0_43, %c0_44] : memref<2x8xf32, #tpu.memory_space<vmem>>, vector<2x8xf32>
      tpu.vector_store %arg12[%c0_43, %c0_44], %109 {strides = array<i32>} : memref<2x8xf32, #tpu.memory_space<vmem>>, vector<2x8xf32>,
    } else {
    }
    return
  }
  func.func @transform_0(%arg0: i32) -> (i32, i32) {
    %c0_i32 = arith.constant 0 : i32
    %c0_i32_0 = arith.constant 0 : i32
    %c0_i32_1 = arith.constant 0 : i32
    return %c0_i32, %c0_i32_0 : i32, i32
  }
  func.func @transform_1(%arg0: i32) -> (i32, i32) {
    %c0_i32 = arith.constant 0 : i32
    %c0_i32_0 = arith.constant 0 : i32
    %c0_i32_1 = arith.constant 0 : i32
    return %c0_i32, %c0_i32_0 : i32, i32
  }
  func.func @transform_2(%arg0: i32) -> (i32, i32) {
    %c0_i32 = arith.constant 0 : i32
    %c0_i32_0 = arith.constant 0 : i32
    %c0_i32_1 = arith.constant 0 : i32
    return %c0_i32, %c0_i32_0 : i32, i32
  }
  func.func @transform_3(%arg0: i32) -> (i32, i32) {
    %c0_i32 = arith.constant 0 : i32
    %c0_i32_0 = arith.constant 0 : i32
    %c0_i32_1 = arith.constant 0 : i32
    return %c0_i32, %c0_i32_0 : i32, i32
  }
  func.func @transform_4(%arg0: i32) -> (i32, i32, i32) {
    %c0_i32 = arith.constant 0 : i32
    %c0_i32_0 = arith.constant 0 : i32
    %c0_i32_1 = arith.constant 0 : i32
    return %arg0, %c0_i32, %c0_i32_0 : i32, i32, i32
  }
  func.func @transform_5(%arg0: i32) -> (i32, i32, i32) {
    %c0_i32 = arith.constant 0 : i32
    %c0_i32_0 = arith.constant 0 : i32
    %c0_i32_1 = arith.constant 0 : i32
    return %arg0, %c0_i32, %c0_i32_0 : i32, i32, i32
  }
  func.func @transform_6(%arg0: i32) -> (i32, i32, i32) {
    %c0_i32 = arith.constant 0 : i32
    %c0_i32_0 = arith.constant 0 : i32
    %c0_i32_1 = arith.constant 0 : i32
    return %arg0, %c0_i32, %c0_i32_0 : i32, i32, i32
  }
  func.func @transform_7(%arg0: i32) -> (i32, i32, i32) {
    %c0_i32 = arith.constant 0 : i32
    %c0_i32_0 = arith.constant 0 : i32
    %c0_i32_1 = arith.constant 0 : i32
    return %arg0, %c0_i32, %c0_i32_0 : i32, i32, i32
  }
  func.func @transform_8(%arg0: i32) -> (i32, i32, i32) {
    %c0_i32 = arith.constant 0 : i32
    %c0_i32_0 = arith.constant 0 : i32
    %c0_i32_1 = arith.constant 0 : i32
    return %arg0, %c0_i32, %c0_i32_0 : i32, i32, i32
  }
  func.func @transform_9(%arg0: i32) -> (i32, i32, i32) {
    %c0_i32 = arith.constant 0 : i32
    %c0_i32_0 = arith.constant 0 : i32
    %c0_i32_1 = arith.constant 0 : i32
    return %arg0, %c0_i32, %c0_i32_0 : i32, i32, i32
  }
  func.func @transform_10(%arg0: i32) -> (i32, i32) {
    %c0_i32 = arith.constant 0 : i32
    %c0_i32_0 = arith.constant 0 : i32
    %c0_i32_1 = arith.constant 0 : i32
    return %c0_i32, %c0_i32_0 : i32, i32
  }
  func.func @transform_11(%arg0: i32) -> (i32, i32) {
    %c0_i32 = arith.constant 0 : i32
    %c0_i32_0 = arith.constant 0 : i32
    %c0_i32_1 = arith.constant 0 : i32
    return %c0_i32, %c0_i32_0 : i32, i32
  }
}

</mosaic_0001>

<llo_original>
// kernel: tpu_custom_call.1
$region0: #{tpu_custom_call.1}
  #allocation0 [shape = 'u32[]', space=smem, size = 0x4, offset = 0x4, fixed_abs, tag = 'smem constant byte address 0x4 - core index']
  #allocation1 [shape = 'u32[144,128]{1,0:T(1,128)}', space=vmem, size = 0x12000, scoped, tag = 'internal scratch']
  #allocation2 [shape = 'f32[2,32]{1,0:T(2,128)}', space=vmem, size = 0x400, scoped, tag = 'scratch operand']
  %s0 = inlined_call_operand.vmem [shape: f32[2,8], index: 0, kind: input, shape index: {}]
  %s1 = inlined_call_operand.vmem [shape: f32[2,16], index: 1, kind: input, shape index: {}]
  %s2 = inlined_call_operand.vmem [shape: bf16[16,32], index: 2, kind: input, shape index: {}]
  %s3 = inlined_call_operand.vmem [shape: f32[2,32], index: 3, kind: input, shape index: {}]
  %s4 = inlined_call_operand.vmem [shape: bf16[2,32,32], index: 4, kind: input, shape index: {}]
  %s5 = inlined_call_operand.vmem [shape: bf16[2,32,32], index: 5, kind: input, shape index: {}]
  %s6 = inlined_call_operand.vmem [shape: f32[2,7,32], index: 6, kind: input, shape index: {}]
  %s7 = inlined_call_operand.vmem [shape: bf16[2,32,2048], index: 7, kind: input, shape index: {}]
  %s8 = inlined_call_operand.vmem [shape: f32[2,1,2048], index: 8, kind: input, shape index: {}]
  %s9 = inlined_call_operand.vmem [shape: bf16[2,2048,32], index: 9, kind: input, shape index: {}]
  %s10 = inlined_call_operand.vmem [shape: bf16[32,8], index: 10, kind: input, shape index: {}]
  %s11 = inlined_call_operand.hbm [shape: f32[2,8], index: 11, kind: output, shape index: {}]
  %s12 = sld [smem:[#allocation0]]
  $region89: #{tpu_custom_call.1} parent=0
    _
  %s14 = ssub.s32 1, %s12
  %s15 = scalar_select 0, %s14, %s12
  $region1: #{tpu_custom_call.1} parent=0
    #allocation3 [shape = 'u8[1024]{0}', space=smem, size = 0x400, scoped, tag = 'input window, operand 0, single buffered']
    #allocation4 [shape = 's32[2]{0}', space=sflag, size = 0x8, scoped, tag = 'scoped memory for tpu_custom_call.1']
    #allocation5 [shape = 's32[2]{0}', space=sflag, size = 0x8, scoped, tag = 'scoped memory for tpu_custom_call.1']
    #allocation6 [shape = 'u8[1024]{0}', space=vmem, size = 0x400, scoped, tag = 'output window, operand 0, single buffered']
    %16 = vsyncpa [#allocation5], 0
    %17 = vsyncpa [#allocation4], 0
    loop: start=0, step=1, limit=4
    $region2: #{tpu_custom_call.1} parent=1 // loop_pre_header
      _
    $region3: #{tpu_custom_call.1} parent=1 // loop_header
      %s19 = sphi 0, %s23
      %p20 = scmp.ge.s32.totalorder %s19, 4
      %s27 = sphi 0, %s27
      %s29 = sphi 0, %s27
      %s30 = sphi 0, %s29
      %s44 = sphi 0, %s30
      %s48 = sphi 0, %s48
      %s50 = sphi 0, %s48
      %s51 = sphi 0, %s50
      %s65 = sphi 0, %s51
      %s69 = sphi 0, %s69
      %s71 = sphi 0, %s69
      %s72 = sphi 0, %s71
      %s86 = sphi 0, %s72
      %s90 = sphi 0, %s90
      %s92 = sphi 0, %s90
      %s93 = sphi 0, %s92
      %s107 = sphi 0, %s93
      %s113 = sphi 0, %s115
      %s116 = sphi 0, %s113
      %s117 = sphi 0, %s116
      %s133 = sphi 0, %s117
      %s139 = sphi 0, %s141
      %s142 = sphi 0, %s139
      %s143 = sphi 0, %s142
      %s159 = sphi 0, %s143
      %s165 = sphi 0, %s167
      %s168 = sphi 0, %s165
      %s169 = sphi 0, %s168
      %s185 = sphi 0, %s169
      %s191 = sphi 0, %s193
      %s194 = sphi 0, %s191
      %s195 = sphi 0, %s194
      %s211 = sphi 0, %s195
      %s217 = sphi 0, %s219
      %s220 = sphi 0, %s217
      %s221 = sphi 0, %s220
      %s237 = sphi 0, %s221
      %s243 = sphi 0, %s245
      %s246 = sphi 0, %s243
      %s247 = sphi 0, %s246
      %s263 = sphi 0, %s247
      %s267 = sphi 0, %s267
      %s269 = sphi 0, %s267
      %s270 = sphi 0, %s269
      %s284 = sphi 0, %s270
      %s288 = sphi 0, %s288
      %s290 = sphi 0, %s288
      %s291 = sphi 0, %s290
      %s305 = sphi 0, %s291
    $region4: #{tpu_custom_call.1} parent=1 // loop_header_branch
      %22 = sbr.rel (%p20) target = $region8
    $region5: #{tpu_custom_call.1} parent=1 // loop_body
      %s24 = ssub.s32 %s19, 1
      %s25 = ssub.s32 %s19, 2
      %s26 = sadd.s32 %s19, 1
      %s28 = sadd.s32 %s27, 1
      %p31 = scmp.eq.s32.totalorder %s19, 1
      %p32 = scmp.ne.s32.totalorder %s27, %s29
      %p33 = scmp.eq.s32.totalorder %s19, 0
      %p34 = por %p32, %p33
      %p35 = scmp.ne.s32.totalorder %s27, %s29
      %p36 = scmp.eq.s32.totalorder %s24, 1
      %p37 = por %p35, %p36
      %p38 = scmp.ne.s32.totalorder %s29, %s30
      %p39 = scmp.eq.s32.totalorder %s24, 0
      %p40 = por %p38, %p39
      %p41 = scmp.ne.s32.totalorder %s29, %s30
      %p42 = scmp.eq.s32.totalorder %s25, 1
      %p43 = por %p41, %p42
      %p45 = scmp.ne.s32.totalorder %s30, %s44
      %p46 = scmp.eq.s32.totalorder %s25, 0
      %p47 = por %p45, %p46
      %s49 = sadd.s32 %s48, 1
      %p52 = scmp.eq.s32.totalorder %s19, 1
      %p53 = scmp.ne.s32.totalorder %s48, %s50
      %p54 = scmp.eq.s32.totalorder %s19, 0
      %p55 = por %p53, %p54
      %p56 = scmp.ne.s32.totalorder %s48, %s50
      %p57 = scmp.eq.s32.totalorder %s24, 1
      %p58 = por %p56, %p57
      %p59 = scmp.ne.s32.totalorder %s50, %s51
      %p60 = scmp.eq.s32.totalorder %s24, 0
      %p61 = por %p59, %p60
      %p62 = scmp.ne.s32.totalorder %s50, %s51
      %p63 = scmp.eq.s32.totalorder %s25, 1
      %p64 = por %p62, %p63
      %p66 = scmp.ne.s32.totalorder %s51, %s65
      %p67 = scmp.eq.s32.totalorder %s25, 0
      %p68 = por %p66, %p67
      %s70 = sadd.s32 %s69, 1
      %p73 = scmp.eq.s32.totalorder %s19, 1
      %p74 = scmp.ne.s32.totalorder %s69, %s71
      %p75 = scmp.eq.s32.totalorder %s19, 0
      %p76 = por %p74, %p75
      %p77 = scmp.ne.s32.totalorder %s69, %s71
      %p78 = scmp.eq.s32.totalorder %s24, 1
      %p79 = por %p77, %p78
      %p80 = scmp.ne.s32.totalorder %s71, %s72
      %p81 = scmp.eq.s32.totalorder %s24, 0
      %p82 = por %p80, %p81
      %p83 = scmp.ne.s32.totalorder %s71, %s72
      %p84 = scmp.eq.s32.totalorder %s25, 1
      %p85 = por %p83, %p84
      %p87 = scmp.ne.s32.totalorder %s72, %s86
      %p88 = scmp.eq.s32.totalorder %s25, 0
      %p89 = por %p87, %p88
      %s91 = sadd.s32 %s90, 1
      %p94 = scmp.eq.s32.totalorder %s19, 1
      %p95 = scmp.ne.s32.totalorder %s90, %s92
      %p96 = scmp.eq.s32.totalorder %s19, 0
      %p97 = por %p95, %p96
      %p98 = scmp.ne.s32.totalorder %s90, %s92
      %p99 = scmp.eq.s32.totalorder %s24, 1
      %p100 = por %p98, %p99
      %p101 = scmp.ne.s32.totalorder %s92, %s93
      %p102 = scmp.eq.s32.totalorder %s24, 0
      %p103 = por %p101, %p102
      %p104 = scmp.ne.s32.totalorder %s92, %s93
      %p105 = scmp.eq.s32.totalorder %s25, 1
      %p106 = por %p104, %p105
      %p108 = scmp.ne.s32.totalorder %s93, %s107
      %p109 = scmp.eq.s32.totalorder %s25, 0
      %p110 = por %p108, %p109
      %s111 = ssub.s32 %s19, %s26
      %p112 = scmp.eq.s32.totalorder %s111, 0
      %s114 = sadd.s32 %s113, 1
      %s115 = scalar_select %p112, %s113, %s114
      %p118 = pneg %p112
      %p119 = scmp.eq.s32.totalorder %s19, 1
      %p120 = por %p118, %p119
      %p121 = scmp.ne.s32.totalorder %s113, %s116
      %p122 = scmp.eq.s32.totalorder %s19, 0
      %p123 = por %p121, %p122
      %p124 = scmp.ne.s32.totalorder %s113, %s116
      %p125 = scmp.eq.s32.totalorder %s24, 1
      %p126 = por %p124, %p125
      %p127 = scmp.ne.s32.totalorder %s116, %s117
      %p128 = scmp.eq.s32.totalorder %s24, 0
      %p129 = por %p127, %p128
      %p130 = scmp.ne.s32.totalorder %s116, %s117
      %p131 = scmp.eq.s32.totalorder %s25, 1
      %p132 = por %p130, %p131
      %p134 = scmp.ne.s32.totalorder %s117, %s133
      %p135 = scmp.eq.s32.totalorder %s25, 0
      %p136 = por %p134, %p135
      %s137 = ssub.s32 %s19, %s26
      %p138 = scmp.eq.s32.totalorder %s137, 0
      %s140 = sadd.s32 %s139, 1
      %s141 = scalar_select %p138, %s139, %s140
      %p144 = pneg %p138
      %p145 = scmp.eq.s32.totalorder %s19, 1
      %p146 = por %p144, %p145
      %p147 = scmp.ne.s32.totalorder %s139, %s142
      %p148 = scmp.eq.s32.totalorder %s19, 0
      %p149 = por %p147, %p148
      %p150 = scmp.ne.s32.totalorder %s139, %s142
      %p151 = scmp.eq.s32.totalorder %s24, 1
      %p152 = por %p150, %p151
      %p153 = scmp.ne.s32.totalorder %s142, %s143
      %p154 = scmp.eq.s32.totalorder %s24, 0
      %p155 = por %p153, %p154
      %p156 = scmp.ne.s32.totalorder %s142, %s143
      %p157 = scmp.eq.s32.totalorder %s25, 1
      %p158 = por %p156, %p157
      %p160 = scmp.ne.s32.totalorder %s143, %s159
      %p161 = scmp.eq.s32.totalorder %s25, 0
      %p162 = por %p160, %p161
      %s163 = ssub.s32 %s19, %s26
      %p164 = scmp.eq.s32.totalorder %s163, 0
      %s166 = sadd.s32 %s165, 1
      %s167 = scalar_select %p164, %s165, %s166
      %p170 = pneg %p164
      %p171 = scmp.eq.s32.totalorder %s19, 1
      %p172 = por %p170, %p171
      %p173 = scmp.ne.s32.totalorder %s165, %s168
      %p174 = scmp.eq.s32.totalorder %s19, 0
      %p175 = por %p173, %p174
      %p176 = scmp.ne.s32.totalorder %s165, %s168
      %p177 = scmp.eq.s32.totalorder %s24, 1
      %p178 = por %p176, %p177
      %p179 = scmp.ne.s32.totalorder %s168, %s169
      %p180 = scmp.eq.s32.totalorder %s24, 0
      %p181 = por %p179, %p180
      %p182 = scmp.ne.s32.totalorder %s168, %s169
      %p183 = scmp.eq.s32.totalorder %s25, 1
      %p184 = por %p182, %p183
      %p186 = scmp.ne.s32.totalorder %s169, %s185
      %p187 = scmp.eq.s32.totalorder %s25, 0
      %p188 = por %p186, %p187
      %s189 = ssub.s32 %s19, %s26
      %p190 = scmp.eq.s32.totalorder %s189, 0
      %s192 = sadd.s32 %s191, 1
      %s193 = scalar_select %p190, %s191, %s192
      %p196 = pneg %p190
      %p197 = scmp.eq.s32.totalorder %s19, 1
      %p198 = por %p196, %p197
      %p199 = scmp.ne.s32.totalorder %s191, %s194
      %p200 = scmp.eq.s32.totalorder %s19, 0
      %p201 = por %p199, %p200
      %p202 = scmp.ne.s32.totalorder %s191, %s194
      %p203 = scmp.eq.s32.totalorder %s24, 1
      %p204 = por %p202, %p203
      %p205 = scmp.ne.s32.totalorder %s194, %s195
      %p206 = scmp.eq.s32.totalorder %s24, 0
      %p207 = por %p205, %p206
      %p208 = scmp.ne.s32.totalorder %s194, %s195
      %p209 = scmp.eq.s32.totalorder %s25, 1
      %p210 = por %p208, %p209
      %p212 = scmp.ne.s32.totalorder %s195, %s211
      %p213 = scmp.eq.s32.totalorder %s25, 0
      %p214 = por %p212, %p213
      %s215 = ssub.s32 %s19, %s26
      %p216 = scmp.eq.s32.totalorder %s215, 0
      %s218 = sadd.s32 %s217, 1
      %s219 = scalar_select %p216, %s217, %s218
      %p222 = pneg %p216
      %p223 = scmp.eq.s32.totalorder %s19, 1
      %p224 = por %p222, %p223
      %p225 = scmp.ne.s32.totalorder %s217, %s220
      %p226 = scmp.eq.s32.totalorder %s19, 0
      %p227 = por %p225, %p226
      %p228 = scmp.ne.s32.totalorder %s217, %s220
      %p229 = scmp.eq.s32.totalorder %s24, 1
      %p230 = por %p228, %p229
      %p231 = scmp.ne.s32.totalorder %s220, %s221
      %p232 = scmp.eq.s32.totalorder %s24, 0
      %p233 = por %p231, %p232
      %p234 = scmp.ne.s32.totalorder %s220, %s221
      %p235 = scmp.eq.s32.totalorder %s25, 1
      %p236 = por %p234, %p235
      %p238 = scmp.ne.s32.totalorder %s221, %s237
      %p239 = scmp.eq.s32.totalorder %s25, 0
      %p240 = por %p238, %p239
      %s241 = ssub.s32 %s19, %s26
      %p242 = scmp.eq.s32.totalorder %s241, 0
      %s244 = sadd.s32 %s243, 1
      %s245 = scalar_select %p242, %s243, %s244
      %p248 = pneg %p242
      %p249 = scmp.eq.s32.totalorder %s19, 1
      %p250 = por %p248, %p249
      %p251 = scmp.ne.s32.totalorder %s243, %s246
      %p252 = scmp.eq.s32.totalorder %s19, 0
      %p253 = por %p251, %p252
      %p254 = scmp.ne.s32.totalorder %s243, %s246
      %p255 = scmp.eq.s32.totalorder %s24, 1
      %p256 = por %p254, %p255
      %p257 = scmp.ne.s32.totalorder %s246, %s247
      %p258 = scmp.eq.s32.totalorder %s24, 0
      %p259 = por %p257, %p258
      %p260 = scmp.ne.s32.totalorder %s246, %s247
      %p261 = scmp.eq.s32.totalorder %s25, 1
      %p262 = por %p260, %p261
      %p264 = scmp.ne.s32.totalorder %s247, %s263
      %p265 = scmp.eq.s32.totalorder %s25, 0
      %p266 = por %p264, %p265
      %s268 = sadd.s32 %s267, 1
      %p271 = scmp.eq.s32.totalorder %s19, 1
      %p272 = scmp.ne.s32.totalorder %s267, %s269
      %p273 = scmp.eq.s32.totalorder %s19, 0
      %p274 = por %p272, %p273
      %p275 = scmp.ne.s32.totalorder %s267, %s269
      %p276 = scmp.eq.s32.totalorder %s24, 1
      %p277 = por %p275, %p276
      %p278 = scmp.ne.s32.totalorder %s269, %s270
      %p279 = scmp.eq.s32.totalorder %s24, 0
      %p280 = por %p278, %p279
      %p281 = scmp.ne.s32.totalorder %s269, %s270
      %p282 = scmp.eq.s32.totalorder %s25, 1
      %p283 = por %p281, %p282
      %p285 = scmp.ne.s32.totalorder %s270, %s284
      %p286 = scmp.eq.s32.totalorder %s25, 0
      %p287 = por %p285, %p286
      %s289 = sadd.s32 %s288, 1
      %p292 = scmp.eq.s32.totalorder %s19, 1
      %p293 = scmp.ne.s32.totalorder %s288, %s290
      %p294 = scmp.eq.s32.totalorder %s19, 0
      %p295 = por %p293, %p294
      %p296 = scmp.ne.s32.totalorder %s288, %s290
      %p297 = scmp.eq.s32.totalorder %s24, 1
      %p298 = por %p296, %p297
      %p299 = scmp.ne.s32.totalorder %s290, %s291
      %p300 = scmp.eq.s32.totalorder %s24, 0
      %p301 = por %p299, %p300
      %p302 = scmp.ne.s32.totalorder %s290, %s291
      %p303 = scmp.eq.s32.totalorder %s25, 1
      %p304 = por %p302, %p303
      %p306 = scmp.ne.s32.totalorder %s291, %s305
      %p307 = scmp.eq.s32.totalorder %s25, 0
      %p308 = por %p306, %p307
      %p309 = scmp.le.s32.totalorder 1, %s19
      %p310 = scmp.lt.s32.totalorder %s19, 3
      %p311 = pnand %p309, %p310
      %p312 = pneg %p311
      // Predicated region
      $region9: #{tpu_custom_call.1} parent=5 // pred_check
        _
      $region10: #{tpu_custom_call.1} parent=5 // pred_check_branch
        %314 = sbr.rel (%p311) target = $region12
      $region11: #{tpu_custom_call.1} parent=5 // pred_region
        %s315 = ssub.s32 %s19, 1
        // Predicated region
        $region13: #{tpu_custom_call.1} parent=11 // pred_check
          %p316 = pneg %p40
        $region14: #{tpu_custom_call.1} parent=11 // pred_check_branch
          %318 = sbr.rel (%p316) target = $region16
        $region15: #{tpu_custom_call.1} parent=11 // pred_region
          %s320 = ssub.s32 32, 32
          %321 = vsyncadd [#allocation5], %s320
          %s323 = sshll.u32 %s0, 4
          %s324 = int_to_ptr.vmem [resolvable:$true] %s323
          %326 = dma.vmem_to_smem %s324, 32, [#allocation3], [#allocation5]
        $region16: #{tpu_custom_call.1} parent=11 // pred_fallthru
          _
        // Predicated region
        $region17: #{tpu_custom_call.1} parent=11 // pred_check
          %p327 = pneg %p61
        $region18: #{tpu_custom_call.1} parent=11 // pred_check_branch
          %329 = sbr.rel (%p327) target = $region20
        $region19: #{tpu_custom_call.1} parent=11 // pred_region
          _
        $region20: #{tpu_custom_call.1} parent=11 // pred_fallthru
          _
        // Predicated region
        $region21: #{tpu_custom_call.1} parent=11 // pred_check
          %p330 = pneg %p82
        $region22: #{tpu_custom_call.1} parent=11 // pred_check_branch
          %332 = sbr.rel (%p330) target = $region24
        $region23: #{tpu_custom_call.1} parent=11 // pred_region
          _
        $region24: #{tpu_custom_call.1} parent=11 // pred_fallthru
          _
        // Predicated region
        $region25: #{tpu_custom_call.1} parent=11 // pred_check
          %p333 = pneg %p103
        $region26: #{tpu_custom_call.1} parent=11 // pred_check_branch
          %335 = sbr.rel (%p333) target = $region28
        $region27: #{tpu_custom_call.1} parent=11 // pred_region
          _
        $region28: #{tpu_custom_call.1} parent=11 // pred_fallthru
          _
        // Predicated region
        $region29: #{tpu_custom_call.1} parent=11 // pred_check
          %p336 = pneg %p280
        $region30: #{tpu_custom_call.1} parent=11 // pred_check_branch
          %338 = sbr.rel (%p336) target = $region32
        $region31: #{tpu_custom_call.1} parent=11 // pred_region
          _
        $region32: #{tpu_custom_call.1} parent=11 // pred_fallthru
          _
      $region12: #{tpu_custom_call.1} parent=5 // pred_fallthru
        _
      %p339 = scmp.lt.s32.totalorder %s19, 2
      // Predicated region
      $region33: #{tpu_custom_call.1} parent=5 // pred_check
        %p340 = pneg %p339
      $region34: #{tpu_custom_call.1} parent=5 // pred_check_branch
        %342 = sbr.rel (%p340) target = $region36
      $region35: #{tpu_custom_call.1} parent=5 // pred_region
        // Predicated region
        $region37: #{tpu_custom_call.1} parent=35 // pred_check
          %p343 = pneg %p123
        $region38: #{tpu_custom_call.1} parent=35 // pred_check_branch
          %345 = sbr.rel (%p343) target = $region40
        $region39: #{tpu_custom_call.1} parent=35 // pred_region
          %p346 = scmp.lt.s32.totalorder %s19, 1
          %s347 = scalar_select %p346, %s19, 1
          %s348 = smul.addr %s347, 4
          %s349 = smul.addr %s348, 4
          %s350 = scalar_lea.vmem %s4, %s349
        $region40: #{tpu_custom_call.1} parent=35 // pred_fallthru
          _
        // Predicated region
        $region41: #{tpu_custom_call.1} parent=35 // pred_check
          %p351 = pneg %p149
        $region42: #{tpu_custom_call.1} parent=35 // pred_check_branch
          %353 = sbr.rel (%p351) target = $region44
        $region43: #{tpu_custom_call.1} parent=35 // pred_region
          %p354 = scmp.lt.s32.totalorder %s19, 1
          %s355 = scalar_select %p354, %s19, 1
          %s356 = smul.addr %s355, 4
          %s357 = smul.addr %s356, 4
          %s358 = scalar_lea.vmem %s5, %s357
        $region44: #{tpu_custom_call.1} parent=35 // pred_fallthru
          _
        // Predicated region
        $region45: #{tpu_custom_call.1} parent=35 // pred_check
          %p359 = pneg %p175
        $region46: #{tpu_custom_call.1} parent=35 // pred_check_branch
          %361 = sbr.rel (%p359) target = $region48
        $region47: #{tpu_custom_call.1} parent=35 // pred_region
          %p362 = scmp.lt.s32.totalorder %s19, 1
          %s363 = scalar_select %p362, %s19, 1
          %s364 = smul.addr %s363, 8
          %s365 = scalar_lea.vmem %s6, %s364
        $region48: #{tpu_custom_call.1} parent=35 // pred_fallthru
          _
        // Predicated region
        $region49: #{tpu_custom_call.1} parent=35 // pred_check
          %p366 = pneg %p201
        $region50: #{tpu_custom_call.1} parent=35 // pred_check_branch
          %368 = sbr.rel (%p366) target = $region52
        $region51: #{tpu_custom_call.1} parent=35 // pred_region
          %p369 = scmp.lt.s32.totalorder %s19, 1
          %s370 = scalar_select %p369, %s19, 1
          %s371 = smul.addr %s370, 64
          %s372 = smul.addr %s371, 4
          %s373 = scalar_lea.vmem %s7, %s372
        $region52: #{tpu_custom_call.1} parent=35 // pred_fallthru
          _
        // Predicated region
        $region53: #{tpu_custom_call.1} parent=35 // pred_check
          %p374 = pneg %p227
        $region54: #{tpu_custom_call.1} parent=35 // pred_check_branch
          %376 = sbr.rel (%p374) target = $region56
        $region55: #{tpu_custom_call.1} parent=35 // pred_region
          %p377 = scmp.lt.s32.totalorder %s19, 1
          %s378 = scalar_select %p377, %s19, 1
          %s379 = smul.addr %s378, 16
          %s380 = scalar_lea.vmem %s8, %s379
        $region56: #{tpu_custom_call.1} parent=35 // pred_fallthru
          _
        // Predicated region
        $region57: #{tpu_custom_call.1} parent=35 // pred_check
          %p381 = pneg %p253
        $region58: #{tpu_custom_call.1} parent=35 // pred_check_branch
          %383 = sbr.rel (%p381) target = $region60
        $region59: #{tpu_custom_call.1} parent=35 // pred_region
          %p384 = scmp.lt.s32.totalorder %s19, 1
          %s385 = scalar_select %p384, %s19, 1
          %s386 = smul.addr %s385, 256
          %s387 = smul.addr %s386, 4
          %s388 = scalar_lea.vmem %s9, %s387
        $region60: #{tpu_custom_call.1} parent=35 // pred_fallthru
          _
      $region36: #{tpu_custom_call.1} parent=5 // pred_fallthru
        _
      %p389 = scmp.le.s32.totalorder 1, %s19
      %p390 = scmp.lt.s32.totalorder %s19, 3
      %p391 = pnand %p389, %p390
      %p392 = pneg %p391
      // Predicated region
      $region61: #{tpu_custom_call.1} parent=5 // pred_check
        _
      $region62: #{tpu_custom_call.1} parent=5 // pred_check_branch
        %394 = sbr.rel (%p391) target = $region64
      $region63: #{tpu_custom_call.1} parent=5 // pred_region
        %s395 = ssub.s32 %s19, 1
        // Predicated region
        $region65: #{tpu_custom_call.1} parent=63 // pred_check
          %p396 = pneg %p40
        $region66: #{tpu_custom_call.1} parent=63 // pred_check_branch
          %398 = sbr.rel (%p396) target = $region68
        $region67: #{tpu_custom_call.1} parent=63 // pred_region
          %399 = dma.done [#allocation5], 32
        $region68: #{tpu_custom_call.1} parent=63 // pred_fallthru
          _
        %400 = sfence
        %p401 = pneg %p40
        %p402 = pneg %p37
        %p403 = pneg %p61
        %p404 = pneg %p58
        %p405 = pneg %p82
        %p406 = pneg %p79
        %p407 = pneg %p103
        %p408 = pneg %p100
        %p409 = scmp.lt.s32.totalorder %s24, 1
        %s410 = scalar_select %p409, %s24, 1
        %s411 = smul.addr %s410, 4
        %s412 = smul.addr %s411, 4
        %s413 = scalar_lea.vmem %s4, %s412
        %p414 = pneg %p129
        %p415 = pneg %p126
        %p416 = scmp.lt.s32.totalorder %s24, 1
        %s417 = scalar_select %p416, %s24, 1
        %s418 = smul.addr %s417, 4
        %s419 = smul.addr %s418, 4
        %s420 = scalar_lea.vmem %s5, %s419
        %p421 = pneg %p155
        %p422 = pneg %p152
        %p423 = scmp.lt.s32.totalorder %s24, 1
        %s424 = scalar_select %p423, %s24, 1
        %s425 = smul.addr %s424, 8
        %s426 = scalar_lea.vmem %s6, %s425
        %p427 = pneg %p181
        %p428 = pneg %p178
        %p429 = scmp.lt.s32.totalorder %s24, 1
        %s430 = scalar_select %p429, %s24, 1
        %s431 = smul.addr %s430, 64
        %s432 = smul.addr %s431, 4
        %s433 = scalar_lea.vmem %s7, %s432
        %p434 = pneg %p207
        %p435 = pneg %p204
        %p436 = scmp.lt.s32.totalorder %s24, 1
        %s437 = scalar_select %p436, %s24, 1
        %s438 = smul.addr %s437, 16
        %s439 = scalar_lea.vmem %s8, %s438
        %p440 = pneg %p233
        %p441 = pneg %p230
        %p442 = scmp.lt.s32.totalorder %s24, 1
        %s443 = scalar_select %p442, %s24, 1
        %s444 = smul.addr %s443, 256
        %s445 = smul.addr %s444, 4
        %s446 = scalar_lea.vmem %s9, %s445
        %p447 = pneg %p259
        %p448 = pneg %p256
        %p449 = pneg %p280
        %p450 = pneg %p277
        %p451 = pneg %p301
        %p452 = pneg %p298
        %p453 = scmp.lt.s32.totalorder %s24, 1
        %s454 = scalar_select %p453, %s24, 1
        %s455 = smul.addr %s454, 4
        %s456 = smul.addr %s455, 4
        %s457 = scalar_lea.vmem %s4, %s456
        %p458 = scmp.lt.s32.totalorder %s24, 1
        %s459 = scalar_select %p458, %s24, 1
        %s460 = smul.addr %s459, 4
        %s461 = smul.addr %s460, 4
        %s462 = scalar_lea.vmem %s5, %s461
        %p463 = scmp.lt.s32.totalorder %s24, 1
        %s464 = scalar_select %p463, %s24, 1
        %s465 = smul.addr %s464, 8
        %s466 = scalar_lea.vmem %s6, %s465
        %p467 = scmp.lt.s32.totalorder %s24, 1
        %s468 = scalar_select %p467, %s24, 1
        %s469 = smul.addr %s468, 64
        %s470 = smul.addr %s469, 4
        %s471 = scalar_lea.vmem %s7, %s470
        %p472 = scmp.lt.s32.totalorder %s24, 1
        %s473 = scalar_select %p472, %s24, 1
        %s474 = smul.addr %s473, 16
        %s475 = scalar_lea.vmem %s8, %s474
        %p476 = scmp.lt.s32.totalorder %s24, 1
        %s477 = scalar_select %p476, %s24, 1
        %s478 = smul.addr %s477, 256
        %s479 = smul.addr %s478, 4
        %s480 = scalar_lea.vmem %s9, %s479
        %p482 = scmp.eq.s32.totalorder %s24, 0
        // Predicated region
        $region69: #{tpu_custom_call.1} parent=63 // pred_check
          %p483 = pneg %p482
        $region70: #{tpu_custom_call.1} parent=63 // pred_check_branch
          %485 = sbr.rel (%p483) target = $region72
        $region71: #{tpu_custom_call.1} parent=63 // pred_region
          %v486 = vld [vmem:[%s1] sm:$0x3]
          %v487 = vpack.c.bf16 %v486, %v486
          %v488 = vld [vmem:[%s2] sm:$0xf]
          %v489 = vld [vmem:[%s2 + $0x4] sm:$0xf]
          %v490 = vld [vmem:[%s3] sm:$0x1]
          %v491 = vlaneseq
          %v492 = vshrl.u32 %v491, 7
          %v493 = vsub.s32 0, %v492
          %v494 = vrot.slane %v490, %v493
          %v497 = vunpack.c.l.b16 %v488
          %v498 = vunpack.c.l.b16 %v489
          %v499 = vpack.c.b16 %v498, %v497
          %vm501 = vcmask 130048
          %v503 = vsel %vm501, %v487, 0
          %505 = vmatprep.subr.bf16.mxu0 0
          %506 = vmatpush1.bf16.msra.mxu0 %v499
          %507 = vmatprep.subr.bf16.mxu0 0
          %508 = vmatpush1.bf16.msra.mxu0 0
          %509 = vmatprep.subr.bf16.mxu0 0
          %510 = vmatpush1.bf16.msra.mxu0 0
          %511 = vmatprep.subr.bf16.mxu0 0
          %512 = vmatpush1.bf16.msra.mxu0 0
          %513 = vmatprep.subr.bf16.mxu0 0
          %514 = vmatpush1.bf16.msra.mxu0 0
          %515 = vmatprep.subr.bf16.mxu0 0
          %516 = vmatpush1.bf16.msra.mxu0 0
          %517 = vmatprep.subr.bf16.mxu0 0
          %518 = vmatpush1.bf16.msra.mxu0 0
          %519 = vmatprep.subr.bf16.mxu0 0
          %520 = vmatpush1.bf16.msra.mxu0 0
          %521 = vmatprep.subr.bf16.mxu0 0
          %522 = vmatpush1.bf16.msra.mxu0 0
          %523 = vmatprep.subr.bf16.mxu0 0
          %524 = vmatpush1.bf16.msra.mxu0 0
          %525 = vmatprep.subr.bf16.mxu0 0
          %526 = vmatpush1.bf16.msra.mxu0 0
          %527 = vmatprep.subr.bf16.mxu0 0
          %528 = vmatpush1.bf16.msra.mxu0 0
          %529 = vmatprep.subr.bf16.mxu0 0
          %530 = vmatpush1.bf16.msra.mxu0 0
          %531 = vmatprep.subr.bf16.mxu0 0
          %532 = vmatpush1.bf16.msra.mxu0 0
          %533 = vmatprep.subr.bf16.mxu0 0
          %534 = vmatpush1.bf16.msra.mxu0 0
          %535 = vmatprep.subr.bf16.mxu0 0
          %536 = vmatpush1.bf16.msra.mxu0 0
          %537 = vmatprep.mubr.bf16.mxu0 0
          %538 = vmatmul.mubr.bf16.gmra.mrb[0].mxu0 %v503
          %v539 = vpop.f32.mrb[0].mxu0
          %v540 = vadd.f32 %v494, %v539
          %v541 = vpop.f32.mrb[0].mxu0
          %v542 = vpop.f32.mrb[0].mxu0
          %v543 = vpop.f32.mrb[0].mxu0
          %544 = vdwg.mxu0
          %v545 = vlaneseq
          %v546 = vand.u32 %v545, 127
          %vm547 = vcmp.eq.s32.totalorder %v546, 0
          %vm548 = vcmp.eq.s32.totalorder %v546, 31
          %s549 = sld [smem:[#allocation3]]
          %s550 = sld [smem:[#allocation3 + $0x1]]
          %s551 = sld [smem:[#allocation3 + $0x2]]
          %s552 = sld [smem:[#allocation3 + $0x3]]
          %s553 = sld [smem:[#allocation3 + $0x4]]
          %s554 = sld [smem:[#allocation3 + $0x5]]
          %s555 = sld [smem:[#allocation3 + $0x6]]
          %s556 = sld [smem:[#allocation3 + $0x7]]
          %vm557 = vcmask 1047808
          %558 = vrot.lane.b32.xlu0 %v540, 32
          %v559 = vpop.permute.xlu0 %558
          %v560 = vsel %vm557, %v559, %v540
          %561 = vrot.lane.b32.xlu0 %v560, 32
          %v562 = vpop.permute.xlu0 %561
          %v563 = vsel %vm557, %v562, %v540
          %565 = vrot.lane.b32.xlu0 %v563, 97
          %v566 = vpop.permute.xlu0 %565
          %v568 = vsel %vm547, 0.0, %v566
          %569 = vrot.lane.b32.xlu0 %v563, 127
          %v570 = vpop.permute.xlu0 %569
          %v572 = vsel %vm548, 0.0, %v570
          %v573 = vstv %s549
          %v574 = vmul.f32 %v573, %v568
          %v575 = vstv %s550
          %v576 = vmul.f32 %v575, %v540
          %v577 = vadd.f32 %v574, %v576
          %v578 = vstv %s551
          %v579 = vmul.f32 %v578, %v572
          %v580 = vadd.f32 %v577, %v579
          %v581 = vstv %s552
          %v582 = vadd.f32 %v580, %v581
          %v583 = vstv %s555
          %v584 = vsub.f32 %v582, %v583
          %v585 = vstv %s553
          %v586 = vmul.f32 %v585, %v584
          %s587 = sadd.f32 %s556, 1e-05
          %v588 = vstv %s587
          %v589 = vrsqrt.pop %v588
          %s590 = vtos %v589
          %v591 = vstv %s590
          %v592 = vmul.f32 %v586, %v591
          %v593 = vstv %s554
          %v594 = vadd.f32 %v592, %v593
          %v595 = vmax.f32 %v594, 0.0
          %s596 = sld [smem:[#allocation3 + $0x80]]
          %s597 = sld [smem:[#allocation3 + $0x81]]
          %s598 = sld [smem:[#allocation3 + $0x82]]
          %s599 = sld [smem:[#allocation3 + $0x83]]
          %s600 = sld [smem:[#allocation3 + $0x84]]
          %s601 = sld [smem:[#allocation3 + $0x85]]
          %s602 = sld [smem:[#allocation3 + $0x86]]
          %s603 = sld [smem:[#allocation3 + $0x87]]
          %604 = vrot.lane.b32.xlu0 %v595, 32
          %v605 = vpop.permute.xlu0 %604
          %v606 = vsel %vm557, %v605, %v595
          %607 = vrot.lane.b32.xlu0 %v606, 32
          %v608 = vpop.permute.xlu0 %607
          %v609 = vsel %vm557, %v608, %v595
          %611 = vrot.lane.b32.xlu0 %v609, 97
          %v612 = vpop.permute.xlu0 %611
          %v614 = vsel %vm547, 0.0, %v612
          %615 = vrot.lane.b32.xlu0 %v609, 127
          %v616 = vpop.permute.xlu0 %615
          %v618 = vsel %vm548, 0.0, %v616
          %v619 = vstv %s596
          %v620 = vmul.f32 %v619, %v614
          %v621 = vstv %s597
          %v622 = vmul.f32 %v621, %v595
          %v623 = vadd.f32 %v620, %v622
          %v624 = vstv %s598
          %v625 = vmul.f32 %v624, %v618
          %v626 = vadd.f32 %v623, %v625
          %v627 = vstv %s599
          %v628 = vadd.f32 %v626, %v627
          %v629 = vstv %s602
          %v630 = vsub.f32 %v628, %v629
          %v631 = vstv %s600
          %v632 = vmul.f32 %v631, %v630
          %s633 = sadd.f32 %s603, 1e-05
          %v634 = vstv %s633
          %v635 = vrsqrt.pop %v634
          %s636 = vtos %v635
          %v637 = vstv %s636
          %v638 = vmul.f32 %v632, %v637
          %v639 = vstv %s601
          %v640 = vadd.f32 %v638, %v639
          %v641 = vadd.f32 %v640, %v540
          %v642 = vmax.f32 %v641, 0.0
          %vm643 = vcmask 254976
          %644 = vst.msk [vmem:[#allocation2] sm:$0x3] %vm643, %v642
        $region72: #{tpu_custom_call.1} parent=63 // pred_fallthru
          _
        %v645 = vld [vmem:[#allocation2] sm:$0x3]
        %v646 = vld [vmem:[%s466] sm:$0x7f]
        %v647 = vpack.c.bf16 %v645, %v645
        %v648 = vld [vmem:[%s457] sm:$0xf]
        %v649 = vld [vmem:[%s457 + $0x4] sm:$0xf]
        %v650 = vld [vmem:[%s457 + $0x8] sm:$0xf]
        %v651 = vld [vmem:[%s457 + $0xc] sm:$0xf]
        %v652 = vlaneseq
        %v653 = vshrl.u32 %v652, 7
        %v654 = vsub.s32 0, %v653
        %v655 = vrot.slane %v646, %v654
        %v660 = vunpack.c.l.b16 %v648
        %v661 = vunpack.c.l.b16 %v649
        %v662 = vunpack.c.l.b16 %v650
        %v663 = vunpack.c.l.b16 %v651
        %v664 = vpack.c.b16 %v661, %v660
        %v665 = vpack.c.b16 %v663, %v662
        %vm668 = vcmask 261120
        %v670 = vsel %vm668, %v647, 0
        %672 = vmatprep.subr.bf16.mxu0 0
        %673 = vmatpush1.bf16.msra.mxu0 %v664
        %674 = vmatprep.subr.bf16.mxu0 0
        %675 = vmatpush1.bf16.msra.mxu0 %v665
        %676 = vmatprep.subr.bf16.mxu0 0
        %677 = vmatpush1.bf16.msra.mxu0 0
        %678 = vmatprep.subr.bf16.mxu0 0
        %679 = vmatpush1.bf16.msra.mxu0 0
        %680 = vmatprep.subr.bf16.mxu0 0
        %681 = vmatpush1.bf16.msra.mxu0 0
        %682 = vmatprep.subr.bf16.mxu0 0
        %683 = vmatpush1.bf16.msra.mxu0 0
        %684 = vmatprep.subr.bf16.mxu0 0
        %685 = vmatpush1.bf16.msra.mxu0 0
        %686 = vmatprep.subr.bf16.mxu0 0
        %687 = vmatpush1.bf16.msra.mxu0 0
        %688 = vmatprep.subr.bf16.mxu0 0
        %689 = vmatpush1.bf16.msra.mxu0 0
        %690 = vmatprep.subr.bf16.mxu0 0
        %691 = vmatpush1.bf16.msra.mxu0 0
        %692 = vmatprep.subr.bf16.mxu0 0
        %693 = vmatpush1.bf16.msra.mxu0 0
        %694 = vmatprep.subr.bf16.mxu0 0
        %695 = vmatpush1.bf16.msra.mxu0 0
        %696 = vmatprep.subr.bf16.mxu0 0
        %697 = vmatpush1.bf16.msra.mxu0 0
        %698 = vmatprep.subr.bf16.mxu0 0
        %699 = vmatpush1.bf16.msra.mxu0 0
        %700 = vmatprep.subr.bf16.mxu0 0
        %701 = vmatpush1.bf16.msra.mxu0 0
        %702 = vmatprep.subr.bf16.mxu0 0
        %703 = vmatpush1.bf16.msra.mxu0 0
        %704 = vmatprep.mubr.bf16.mxu0 0
        %705 = vmatmul.mubr.bf16.gmra.mrb[0].mxu0 %v670
        %v706 = vpop.f32.mrb[0].mxu0
        %v707 = vadd.f32 %v655, %v706
        %v708 = vpop.f32.mrb[0].mxu0
        %v709 = vpop.f32.mrb[0].mxu0
        %v710 = vpop.f32.mrb[0].mxu0
        %711 = vdwg.mxu0
        %v712 = vpack.c.bf16 %v707, %v707
        %v713 = vld [vmem:[%s462] sm:$0xf]
        %v714 = vld [vmem:[%s462 + $0x4] sm:$0xf]
        %v715 = vld [vmem:[%s462 + $0x8] sm:$0xf]
        %v716 = vld [vmem:[%s462 + $0xc] sm:$0xf]
        %v717 = vlaneseq
        %v718 = vshrl.u32 %v717, 7
        %v719 = vsub.s32 1, %v718
        %v720 = vrot.slane %v646, %v719
        %v725 = vunpack.c.l.b16 %v713
        %v726 = vunpack.c.l.b16 %v714
        %v727 = vunpack.c.l.b16 %v715
        %v728 = vunpack.c.l.b16 %v716
        %v729 = vpack.c.b16 %v726, %v725
        %v730 = vpack.c.b16 %v728, %v727
        %v734 = vsel %vm668, %v712, 0
        %736 = vmatprep.subr.bf16.mxu0 0
        %737 = vmatpush1.bf16.msra.mxu0 %v729
        %738 = vmatprep.subr.bf16.mxu0 0
        %739 = vmatpush1.bf16.msra.mxu0 %v730
        %740 = vmatprep.subr.bf16.mxu0 0
        %741 = vmatpush1.bf16.msra.mxu0 0
        %742 = vmatprep.subr.bf16.mxu0 0
        %743 = vmatpush1.bf16.msra.mxu0 0
        %744 = vmatprep.subr.bf16.mxu0 0
        %745 = vmatpush1.bf16.msra.mxu0 0
        %746 = vmatprep.subr.bf16.mxu0 0
        %747 = vmatpush1.bf16.msra.mxu0 0
        %748 = vmatprep.subr.bf16.mxu0 0
        %749 = vmatpush1.bf16.msra.mxu0 0
        %750 = vmatprep.subr.bf16.mxu0 0
        %751 = vmatpush1.bf16.msra.mxu0 0
        %752 = vmatprep.subr.bf16.mxu0 0
        %753 = vmatpush1.bf16.msra.mxu0 0
        %754 = vmatprep.subr.bf16.mxu0 0
        %755 = vmatpush1.bf16.msra.mxu0 0
        %756 = vmatprep.subr.bf16.mxu0 0
        %757 = vmatpush1.bf16.msra.mxu0 0
        %758 = vmatprep.subr.bf16.mxu0 0
        %759 = vmatpush1.bf16.msra.mxu0 0
        %760 = vmatprep.subr.bf16.mxu0 0
        %761 = vmatpush1.bf16.msra.mxu0 0
        %762 = vmatprep.subr.bf16.mxu0 0
        %763 = vmatpush1.bf16.msra.mxu0 0
        %764 = vmatprep.subr.bf16.mxu0 0
        %765 = vmatpush1.bf16.msra.mxu0 0
        %766 = vmatprep.subr.bf16.mxu0 0
        %767 = vmatpush1.bf16.msra.mxu0 0
        %768 = vmatprep.mubr.bf16.mxu0 0
        %769 = vmatmul.mubr.bf16.gmra.mrb[0].mxu0 %v734
        %v770 = vpop.f32.mrb[0].mxu0
        %v771 = vadd.f32 %v720, %v770
        %v772 = vpop.f32.mrb[0].mxu0
        %v773 = vpop.f32.mrb[0].mxu0
        %v774 = vpop.f32.mrb[0].mxu0
        %775 = vdwg.mxu0
        %v776 = vadd.f32 %v645, %v771
        %vm777 = vcmask 254976
        %v778 = vsel %vm777, %v776, 0.0
        %779 = vadd.xlane.f32.xlu0 %v778
        %v780 = vpop.xlane.xlu0 %779
        %v781 = vrcp.pop 32.0
        %v782 = vmul.f32 %v780, %v781
        %v783 = vsub.f32 %v776, %v782
        %v784 = vmul.f32 %v783, %v783
        %v785 = vsel %vm777, %v784, 0.0
        %786 = vadd.xlane.f32.xlu0 %v785
        %v787 = vpop.xlane.xlu0 %786
        %v788 = vmul.f32 %v787, %v781
        %v789 = vadd.f32 %v788, 1e-05
        %v790 = vrsqrt.pop %v789
        %v791 = vmul.f32 %v783, %v790
        %v792 = vlaneseq
        %v793 = vshrl.u32 %v792, 7
        %v794 = vsub.s32 3, %v793
        %v795 = vrot.slane %v646, %v794
        %v796 = vmul.f32 %v791, %v795
        %v797 = vlaneseq
        %v798 = vshrl.u32 %v797, 7
        %v799 = vsub.s32 4, %v798
        %v800 = vrot.slane %v646, %v799
        %v801 = vadd.f32 %v796, %v800
        %v802 = vpack.c.bf16 %v801, %v801
        %v803 = vld [vmem:[%s471] sm:$0xff]
        %v804 = vld [vmem:[%s471 + $0x8] sm:$0xff]
        %v805 = vld [vmem:[%s471 + $0x10] sm:$0xff]
        %v806 = vld [vmem:[%s471 + $0x18] sm:$0xff]
        %v807 = vld [vmem:[%s471 + $0x20] sm:$0xff]
        %v808 = vld [vmem:[%s471 + $0x28] sm:$0xff]
        %v809 = vld [vmem:[%s471 + $0x30] sm:$0xff]
        %v810 = vld [vmem:[%s471 + $0x38] sm:$0xff]
        %v811 = vld [vmem:[%s471 + $0x40] sm:$0xff]
        %v812 = vld [vmem:[%s471 + $0x48] sm:$0xff]
        %v813 = vld [vmem:[%s471 + $0x50] sm:$0xff]
        %v814 = vld [vmem:[%s471 + $0x58] sm:$0xff]
        %v815 = vld [vmem:[%s471 + $0x60] sm:$0xff]
        %v816 = vld [vmem:[%s471 + $0x68] sm:$0xff]
        %v817 = vld [vmem:[%s471 + $0x70] sm:$0xff]
        %v818 = vld [vmem:[%s471 + $0x78] sm:$0xff]
        %v819 = vld [vmem:[%s471 + $0x80] sm:$0xff]
        %v820 = vld [vmem:[%s471 + $0x88] sm:$0xff]
        %v821 = vld [vmem:[%s471 + $0x90] sm:$0xff]
        %v822 = vld [vmem:[%s471 + $0x98] sm:$0xff]
        %v823 = vld [vmem:[%s471 + $0xa0] sm:$0xff]
        %v824 = vld [vmem:[%s471 + $0xa8] sm:$0xff]
        %v825 = vld [vmem:[%s471 + $0xb0] sm:$0xff]
        %v826 = vld [vmem:[%s471 + $0xb8] sm:$0xff]
        %v827 = vld [vmem:[%s471 + $0xc0] sm:$0xff]
        %v828 = vld [vmem:[%s471 + $0xc8] sm:$0xff]
        %v829 = vld [vmem:[%s471 + $0xd0] sm:$0xff]
        %v830 = vld [vmem:[%s471 + $0xd8] sm:$0xff]
        %v831 = vld [vmem:[%s471 + $0xe0] sm:$0xff]
        %v832 = vld [vmem:[%s471 + $0xe8] sm:$0xff]
        %v833 = vld [vmem:[%s471 + $0xf0] sm:$0xff]
        %v834 = vld [vmem:[%s471 + $0xf8] sm:$0xff]
        %v835 = vld [vmem:[%s475] sm:$0xff]
        %v836 = vld [vmem:[%s475 + $0x8] sm:$0xff]
        %v839 = vlaneseq
        %v840 = vshrl.u32 %v839, 7
        %v841 = vsub.s32 0, %v840
        %v842 = vrot.slane %v835, %v841
        %v843 = vlaneseq
        %v844 = vshrl.u32 %v843, 7
        %v845 = vsub.s32 1, %v844
        %v846 = vrot.slane %v835, %v845
        %v847 = vlaneseq
        %v848 = vshrl.u32 %v847, 7
        %v849 = vsub.s32 2, %v848
        %v850 = vrot.slane %v835, %v849
        %v851 = vlaneseq
        %v852 = vshrl.u32 %v851, 7
        %v853 = vsub.s32 3, %v852
        %v854 = vrot.slane %v835, %v853
        %v855 = vlaneseq
        %v856 = vshrl.u32 %v855, 7
        %v857 = vsub.s32 4, %v856
        %v858 = vrot.slane %v835, %v857
        %v859 = vlaneseq
        %v860 = vshrl.u32 %v859, 7
        %v861 = vsub.s32 5, %v860
        %v862 = vrot.slane %v835, %v861
        %v863 = vlaneseq
        %v864 = vshrl.u32 %v863, 7
        %v865 = vsub.s32 6, %v864
        %v866 = vrot.slane %v835, %v865
        %v867 = vlaneseq
        %v868 = vshrl.u32 %v867, 7
        %v869 = vsub.s32 7, %v868
        %v870 = vrot.slane %v835, %v869
        %v871 = vlaneseq
        %v872 = vshrl.u32 %v871, 7
        %v873 = vsub.s32 0, %v872
        %v874 = vrot.slane %v836, %v873
        %v875 = vlaneseq
        %v876 = vshrl.u32 %v875, 7
        %v877 = vsub.s32 1, %v876
        %v878 = vrot.slane %v836, %v877
        %v879 = vlaneseq
        %v880 = vshrl.u32 %v879, 7
        %v881 = vsub.s32 2, %v880
        %v882 = vrot.slane %v836, %v881
        %v883 = vlaneseq
        %v884 = vshrl.u32 %v883, 7
        %v885 = vsub.s32 3, %v884
        %v886 = vrot.slane %v836, %v885
        %v887 = vlaneseq
        %v888 = vshrl.u32 %v887, 7
        %v889 = vsub.s32 4, %v888
        %v890 = vrot.slane %v836, %v889
        %v891 = vlaneseq
        %v892 = vshrl.u32 %v891, 7
        %v893 = vsub.s32 5, %v892
        %v894 = vrot.slane %v836, %v893
        %v895 = vlaneseq
        %v896 = vshrl.u32 %v895, 7
        %v897 = vsub.s32 6, %v896
        %v898 = vrot.slane %v836, %v897
        %v899 = vlaneseq
        %v900 = vshrl.u32 %v899, 7
        %v901 = vsub.s32 7, %v900
        %v902 = vrot.slane %v836, %v901
        %v951 = vunpack.c.l.b16 %v803
        %v952 = vunpack.c.h.b16 %v803
        %v953 = vunpack.c.l.b16 %v804
        %v954 = vunpack.c.h.b16 %v804
        %v955 = vunpack.c.l.b16 %v805
        %v956 = vunpack.c.h.b16 %v805
        %v957 = vunpack.c.l.b16 %v806
        %v958 = vunpack.c.h.b16 %v806
        %v959 = vunpack.c.l.b16 %v807
        %v960 = vunpack.c.h.b16 %v807
        %v961 = vunpack.c.l.b16 %v808
        %v962 = vunpack.c.h.b16 %v808
        %v963 = vunpack.c.l.b16 %v809
        %v964 = vunpack.c.h.b16 %v809
        %v965 = vunpack.c.l.b16 %v810
        %v966 = vunpack.c.h.b16 %v810
        %v967 = vunpack.c.l.b16 %v811
        %v968 = vunpack.c.h.b16 %v811
        %v969 = vunpack.c.l.b16 %v812
        %v970 = vunpack.c.h.b16 %v812
        %v971 = vunpack.c.l.b16 %v813
        %v972 = vunpack.c.h.b16 %v813
        %v973 = vunpack.c.l.b16 %v814
        %v974 = vunpack.c.h.b16 %v814
        %v975 = vunpack.c.l.b16 %v815
        %v976 = vunpack.c.h.b16 %v815
        %v977 = vunpack.c.l.b16 %v816
        %v978 = vunpack.c.h.b16 %v816
        %v979 = vunpack.c.l.b16 %v817
        %v980 = vunpack.c.h.b16 %v817
        %v981 = vunpack.c.l.b16 %v818
        %v982 = vunpack.c.h.b16 %v818
        %v983 = vunpack.c.l.b16 %v819
        %v984 = vunpack.c.h.b16 %v819
        %v985 = vunpack.c.l.b16 %v820
        %v986 = vunpack.c.h.b16 %v820
        %v987 = vunpack.c.l.b16 %v821
        %v988 = vunpack.c.h.b16 %v821
        %v989 = vunpack.c.l.b16 %v822
        %v990 = vunpack.c.h.b16 %v822
        %v991 = vunpack.c.l.b16 %v823
        %v992 = vunpack.c.h.b16 %v823
        %v993 = vunpack.c.l.b16 %v824
        %v994 = vunpack.c.h.b16 %v824
        %v995 = vunpack.c.l.b16 %v825
        %v996 = vunpack.c.h.b16 %v825
        %v997 = vunpack.c.l.b16 %v826
        %v998 = vunpack.c.h.b16 %v826
        %v999 = vunpack.c.l.b16 %v827
        %v1000 = vunpack.c.h.b16 %v827
        %v1001 = vunpack.c.l.b16 %v828
        %v1002 = vunpack.c.h.b16 %v828
        %v1003 = vunpack.c.l.b16 %v829
        %v1004 = vunpack.c.h.b16 %v829
        %v1005 = vunpack.c.l.b16 %v830
        %v1006 = vunpack.c.h.b16 %v830
        %v1007 = vunpack.c.l.b16 %v831
        %v1008 = vunpack.c.h.b16 %v831
        %v1009 = vunpack.c.l.b16 %v832
        %v1010 = vunpack.c.h.b16 %v832
        %v1011 = vunpack.c.l.b16 %v833
        %v1012 = vunpack.c.h.b16 %v833
        %v1013 = vunpack.c.l.b16 %v834
        %v1014 = vunpack.c.h.b16 %v834
        %v1015 = vpack.c.b16 %v967, %v951
        %v1016 = vpack.c.b16 %v968, %v952
        %v1017 = vpack.c.b16 %v969, %v953
        %v1018 = vpack.c.b16 %v970, %v954
        %v1019 = vpack.c.b16 %v971, %v955
        %v1020 = vpack.c.b16 %v972, %v956
        %v1021 = vpack.c.b16 %v973, %v957
        %v1022 = vpack.c.b16 %v974, %v958
        %v1023 = vpack.c.b16 %v975, %v959
        %v1024 = vpack.c.b16 %v976, %v960
        %v1025 = vpack.c.b16 %v977, %v961
        %v1026 = vpack.c.b16 %v978, %v962
        %v1027 = vpack.c.b16 %v979, %v963
        %v1028 = vpack.c.b16 %v980, %v964
        %v1029 = vpack.c.b16 %v981, %v965
        %v1030 = vpack.c.b16 %v982, %v966
        %v1031 = vpack.c.b16 %v999, %v983
        %v1032 = vpack.c.b16 %v1000, %v984
        %v1033 = vpack.c.b16 %v1001, %v985
        %v1034 = vpack.c.b16 %v1002, %v986
        %v1035 = vpack.c.b16 %v1003, %v987
        %v1036 = vpack.c.b16 %v1004, %v988
        %v1037 = vpack.c.b16 %v1005, %v989
        %v1038 = vpack.c.b16 %v1006, %v990
        %v1039 = vpack.c.b16 %v1007, %v991
        %v1040 = vpack.c.b16 %v1008, %v992
        %v1041 = vpack.c.b16 %v1009, %v993
        %v1042 = vpack.c.b16 %v1010, %v994
        %v1043 = vpack.c.b16 %v1011, %v995
        %v1044 = vpack.c.b16 %v1012, %v996
        %v1045 = vpack.c.b16 %v1013, %v997
        %v1046 = vpack.c.b16 %v1014, %v998
        %v1080 = vsel %vm668, %v802, 0
        %1082 = vmatprep.subr.bf16.mxu0 %v1016
        %1083 = vmatpush1.bf16.msra.mxu0 %v1015
        %1084 = vmatprep.subr.bf16.mxu0 %v1032
        %1085 = vmatpush1.bf16.msra.mxu0 %v1031
        %1086 = vmatprep.subr.bf16.mxu0 0
        %1087 = vmatpush1.bf16.msra.mxu0 0
        %1088 = vmatprep.subr.bf16.mxu0 0
        %1089 = vmatpush1.bf16.msra.mxu0 0
        %1090 = vmatprep.subr.bf16.mxu0 0
        %1091 = vmatpush1.bf16.msra.mxu0 0
        %1092 = vmatprep.subr.bf16.mxu0 0
        %1093 = vmatpush1.bf16.msra.mxu0 0
        %1094 = vmatprep.subr.bf16.mxu0 0
        %1095 = vmatpush1.bf16.msra.mxu0 0
        %1096 = vmatprep.subr.bf16.mxu0 0
        %1097 = vmatpush1.bf16.msra.mxu0 0
        %1098 = vmatprep.subr.bf16.mxu0 0
        %1099 = vmatpush1.bf16.msra.mxu0 0
        %1100 = vmatprep.subr.bf16.mxu0 0
        %1101 = vmatpush1.bf16.msra.mxu0 0
        %1102 = vmatprep.subr.bf16.mxu0 0
        %1103 = vmatpush1.bf16.msra.mxu0 0
        %1104 = vmatprep.subr.bf16.mxu0 0
        %1105 = vmatpush1.bf16.msra.mxu0 0
        %1106 = vmatprep.subr.bf16.mxu0 0
        %1107 = vmatpush1.bf16.msra.mxu0 0
        %1108 = vmatprep.subr.bf16.mxu0 0
        %1109 = vmatpush1.bf16.msra.mxu0 0
        %1110 = vmatprep.subr.bf16.mxu0 0
        %1111 = vmatpush1.bf16.msra.mxu0 0
        %1112 = vmatprep.subr.bf16.mxu0 0
        %1113 = vmatpush1.bf16.msra.mxu0 0
        %1114 = vmatprep.mubr.bf16.mxu0 0
        %1115 = vmatmul.mubr.bf16.gmra.mrb[0].mxu0 %v1080
        %v1116 = vpop.f32.mrb[0].mxu0
        %v1117 = vadd.f32 %v842, %v1116
        %v1118 = vpop.f32.mrb[0].mxu0
        %v1119 = vadd.f32 %v846, %v1118
        %v1120 = vpop.f32.mrb[0].mxu0
        %v1121 = vpop.f32.mrb[0].mxu0
        %1122 = vdwg.mxu0
        %1123 = vmatprep.subr.bf16.mxu0 %v1018
        %1124 = vmatpush1.bf16.msra.mxu0 %v1017
        %1125 = vmatprep.subr.bf16.mxu0 %v1034
        %1126 = vmatpush1.bf16.msra.mxu0 %v1033
        %1127 = vmatprep.subr.bf16.mxu0 0
        %1128 = vmatpush1.bf16.msra.mxu0 0
        %1129 = vmatprep.subr.bf16.mxu0 0
        %1130 = vmatpush1.bf16.msra.mxu0 0
        %1131 = vmatprep.subr.bf16.mxu0 0
        %1132 = vmatpush1.bf16.msra.mxu0 0
        %1133 = vmatprep.subr.bf16.mxu0 0
        %1134 = vmatpush1.bf16.msra.mxu0 0
        %1135 = vmatprep.subr.bf16.mxu0 0
        %1136 = vmatpush1.bf16.msra.mxu0 0
        %1137 = vmatprep.subr.bf16.mxu0 0
        %1138 = vmatpush1.bf16.msra.mxu0 0
        %1139 = vmatprep.subr.bf16.mxu0 0
        %1140 = vmatpush1.bf16.msra.mxu0 0
        %1141 = vmatprep.subr.bf16.mxu0 0
        %1142 = vmatpush1.bf16.msra.mxu0 0
        %1143 = vmatprep.subr.bf16.mxu0 0
        %1144 = vmatpush1.bf16.msra.mxu0 0
        %1145 = vmatprep.subr.bf16.mxu0 0
        %1146 = vmatpush1.bf16.msra.mxu0 0
        %1147 = vmatprep.subr.bf16.mxu0 0
        %1148 = vmatpush1.bf16.msra.mxu0 0
        %1149 = vmatprep.subr.bf16.mxu0 0
        %1150 = vmatpush1.bf16.msra.mxu0 0
        %1151 = vmatprep.subr.bf16.mxu0 0
        %1152 = vmatpush1.bf16.msra.mxu0 0
        %1153 = vmatprep.subr.bf16.mxu0 0
        %1154 = vmatpush1.bf16.msra.mxu0 0
        %1155 = vmatprep.mubr.bf16.mxu0 0
        %1156 = vmatmul.mubr.bf16.gmra.mrb[0].mxu0 %v1080
        %v1157 = vpop.f32.mrb[0].mxu0
        %v1158 = vadd.f32 %v850, %v1157
        %v1159 = vpop.f32.mrb[0].mxu0
        %v1160 = vadd.f32 %v854, %v1159
        %v1161 = vpop.f32.mrb[0].mxu0
        %v1162 = vpop.f32.mrb[0].mxu0
        %1163 = vdwg.mxu0
        %1164 = vmatprep.subr.bf16.mxu0 %v1020
        %1165 = vmatpush1.bf16.msra.mxu0 %v1019
        %1166 = vmatprep.subr.bf16.mxu0 %v1036
        %1167 = vmatpush1.bf16.msra.mxu0 %v1035
        %1168 = vmatprep.subr.bf16.mxu0 0
        %1169 = vmatpush1.bf16.msra.mxu0 0
        %1170 = vmatprep.subr.bf16.mxu0 0
        %1171 = vmatpush1.bf16.msra.mxu0 0
        %1172 = vmatprep.subr.bf16.mxu0 0
        %1173 = vmatpush1.bf16.msra.mxu0 0
        %1174 = vmatprep.subr.bf16.mxu0 0
        %1175 = vmatpush1.bf16.msra.mxu0 0
        %1176 = vmatprep.subr.bf16.mxu0 0
        %1177 = vmatpush1.bf16.msra.mxu0 0
        %1178 = vmatprep.subr.bf16.mxu0 0
        %1179 = vmatpush1.bf16.msra.mxu0 0
        %1180 = vmatprep.subr.bf16.mxu0 0
        %1181 = vmatpush1.bf16.msra.mxu0 0
        %1182 = vmatprep.subr.bf16.mxu0 0
        %1183 = vmatpush1.bf16.msra.mxu0 0
        %1184 = vmatprep.subr.bf16.mxu0 0
        %1185 = vmatpush1.bf16.msra.mxu0 0
        %1186 = vmatprep.subr.bf16.mxu0 0
        %1187 = vmatpush1.bf16.msra.mxu0 0
        %1188 = vmatprep.subr.bf16.mxu0 0
        %1189 = vmatpush1.bf16.msra.mxu0 0
        %1190 = vmatprep.subr.bf16.mxu0 0
        %1191 = vmatpush1.bf16.msra.mxu0 0
        %1192 = vmatprep.subr.bf16.mxu0 0
        %1193 = vmatpush1.bf16.msra.mxu0 0
        %1194 = vmatprep.subr.bf16.mxu0 0
        %1195 = vmatpush1.bf16.msra.mxu0 0
        %1196 = vmatprep.mubr.bf16.mxu0 0
        %1197 = vmatmul.mubr.bf16.gmra.mrb[0].mxu0 %v1080
        %v1198 = vpop.f32.mrb[0].mxu0
        %v1199 = vadd.f32 %v858, %v1198
        %v1200 = vpop.f32.mrb[0].mxu0
        %v1201 = vadd.f32 %v862, %v1200
        %v1202 = vpop.f32.mrb[0].mxu0
        %v1203 = vpop.f32.mrb[0].mxu0
        %1204 = vdwg.mxu0
        %1205 = vmatprep.subr.bf16.mxu0 %v1022
        %1206 = vmatpush1.bf16.msra.mxu0 %v1021
        %1207 = vmatprep.subr.bf16.mxu0 %v1038
        %1208 = vmatpush1.bf16.msra.mxu0 %v1037
        %1209 = vmatprep.subr.bf16.mxu0 0
        %1210 = vmatpush1.bf16.msra.mxu0 0
        %1211 = vmatprep.subr.bf16.mxu0 0
        %1212 = vmatpush1.bf16.msra.mxu0 0
        %1213 = vmatprep.subr.bf16.mxu0 0
        %1214 = vmatpush1.bf16.msra.mxu0 0
        %1215 = vmatprep.subr.bf16.mxu0 0
        %1216 = vmatpush1.bf16.msra.mxu0 0
        %1217 = vmatprep.subr.bf16.mxu0 0
        %1218 = vmatpush1.bf16.msra.mxu0 0
        %1219 = vmatprep.subr.bf16.mxu0 0
        %1220 = vmatpush1.bf16.msra.mxu0 0
        %1221 = vmatprep.subr.bf16.mxu0 0
        %1222 = vmatpush1.bf16.msra.mxu0 0
        %1223 = vmatprep.subr.bf16.mxu0 0
        %1224 = vmatpush1.bf16.msra.mxu0 0
        %1225 = vmatprep.subr.bf16.mxu0 0
        %1226 = vmatpush1.bf16.msra.mxu0 0
        %1227 = vmatprep.subr.bf16.mxu0 0
        %1228 = vmatpush1.bf16.msra.mxu0 0
        %1229 = vmatprep.subr.bf16.mxu0 0
        %1230 = vmatpush1.bf16.msra.mxu0 0
        %1231 = vmatprep.subr.bf16.mxu0 0
        %1232 = vmatpush1.bf16.msra.mxu0 0
        %1233 = vmatprep.subr.bf16.mxu0 0
        %1234 = vmatpush1.bf16.msra.mxu0 0
        %1235 = vmatprep.subr.bf16.mxu0 0
        %1236 = vmatpush1.bf16.msra.mxu0 0
        %1237 = vmatprep.mubr.bf16.mxu0 0
        %1238 = vmatmul.mubr.bf16.gmra.mrb[0].mxu0 %v1080
        %v1239 = vpop.f32.mrb[0].mxu0
        %v1240 = vadd.f32 %v866, %v1239
        %v1241 = vpop.f32.mrb[0].mxu0
        %v1242 = vadd.f32 %v870, %v1241
        %v1243 = vpop.f32.mrb[0].mxu0
        %v1244 = vpop.f32.mrb[0].mxu0
        %1245 = vdwg.mxu0
        %1246 = vmatprep.subr.bf16.mxu0 %v1024
        %1247 = vmatpush1.bf16.msra.mxu0 %v1023
        %1248 = vmatprep.subr.bf16.mxu0 %v1040
        %1249 = vmatpush1.bf16.msra.mxu0 %v1039
        %1250 = vmatprep.subr.bf16.mxu0 0
        %1251 = vmatpush1.bf16.msra.mxu0 0
        %1252 = vmatprep.subr.bf16.mxu0 0
        %1253 = vmatpush1.bf16.msra.mxu0 0
        %1254 = vmatprep.subr.bf16.mxu0 0
        %1255 = vmatpush1.bf16.msra.mxu0 0
        %1256 = vmatprep.subr.bf16.mxu0 0
        %1257 = vmatpush1.bf16.msra.mxu0 0
        %1258 = vmatprep.subr.bf16.mxu0 0
        %1259 = vmatpush1.bf16.msra.mxu0 0
        %1260 = vmatprep.subr.bf16.mxu0 0
        %1261 = vmatpush1.bf16.msra.mxu0 0
        %1262 = vmatprep.subr.bf16.mxu0 0
        %1263 = vmatpush1.bf16.msra.mxu0 0
        %1264 = vmatprep.subr.bf16.mxu0 0
        %1265 = vmatpush1.bf16.msra.mxu0 0
        %1266 = vmatprep.subr.bf16.mxu0 0
        %1267 = vmatpush1.bf16.msra.mxu0 0
        %1268 = vmatprep.subr.bf16.mxu0 0
        %1269 = vmatpush1.bf16.msra.mxu0 0
        %1270 = vmatprep.subr.bf16.mxu0 0
        %1271 = vmatpush1.bf16.msra.mxu0 0
        %1272 = vmatprep.subr.bf16.mxu0 0
        %1273 = vmatpush1.bf16.msra.mxu0 0
        %1274 = vmatprep.subr.bf16.mxu0 0
        %1275 = vmatpush1.bf16.msra.mxu0 0
        %1276 = vmatprep.subr.bf16.mxu0 0
        %1277 = vmatpush1.bf16.msra.mxu0 0
        %1278 = vmatprep.mubr.bf16.mxu0 0
        %1279 = vmatmul.mubr.bf16.gmra.mrb[0].mxu0 %v1080
        %v1280 = vpop.f32.mrb[0].mxu0
        %v1281 = vadd.f32 %v874, %v1280
        %v1282 = vpop.f32.mrb[0].mxu0
        %v1283 = vadd.f32 %v878, %v1282
        %v1284 = vpop.f32.mrb[0].mxu0
        %v1285 = vpop.f32.mrb[0].mxu0
        %1286 = vdwg.mxu0
        %1287 = vmatprep.subr.bf16.mxu0 %v1026
        %1288 = vmatpush1.bf16.msra.mxu0 %v1025
        %1289 = vmatprep.subr.bf16.mxu0 %v1042
        %1290 = vmatpush1.bf16.msra.mxu0 %v1041
        %1291 = vmatprep.subr.bf16.mxu0 0
        %1292 = vmatpush1.bf16.msra.mxu0 0
        %1293 = vmatprep.subr.bf16.mxu0 0
        %1294 = vmatpush1.bf16.msra.mxu0 0
        %1295 = vmatprep.subr.bf16.mxu0 0
        %1296 = vmatpush1.bf16.msra.mxu0 0
        %1297 = vmatprep.subr.bf16.mxu0 0
        %1298 = vmatpush1.bf16.msra.mxu0 0
        %1299 = vmatprep.subr.bf16.mxu0 0
        %1300 = vmatpush1.bf16.msra.mxu0 0
        %1301 = vmatprep.subr.bf16.mxu0 0
        %1302 = vmatpush1.bf16.msra.mxu0 0
        %1303 = vmatprep.subr.bf16.mxu0 0
        %1304 = vmatpush1.bf16.msra.mxu0 0
        %1305 = vmatprep.subr.bf16.mxu0 0
        %1306 = vmatpush1.bf16.msra.mxu0 0
        %1307 = vmatprep.subr.bf16.mxu0 0
        %1308 = vmatpush1.bf16.msra.mxu0 0
        %1309 = vmatprep.subr.bf16.mxu0 0
        %1310 = vmatpush1.bf16.msra.mxu0 0
        %1311 = vmatprep.subr.bf16.mxu0 0
        %1312 = vmatpush1.bf16.msra.mxu0 0
        %1313 = vmatprep.subr.bf16.mxu0 0
        %1314 = vmatpush1.bf16.msra.mxu0 0
        %1315 = vmatprep.subr.bf16.mxu0 0
        %1316 = vmatpush1.bf16.msra.mxu0 0
        %1317 = vmatprep.subr.bf16.mxu0 0
        %1318 = vmatpush1.bf16.msra.mxu0 0
        %1319 = vmatprep.mubr.bf16.mxu0 0
        %1320 = vmatmul.mubr.bf16.gmra.mrb[0].mxu0 %v1080
        %v1321 = vpop.f32.mrb[0].mxu0
        %v1322 = vadd.f32 %v882, %v1321
        %v1323 = vpop.f32.mrb[0].mxu0
        %v1324 = vadd.f32 %v886, %v1323
        %v1325 = vpop.f32.mrb[0].mxu0
        %v1326 = vpop.f32.mrb[0].mxu0
        %1327 = vdwg.mxu0
        %1328 = vmatprep.subr.bf16.mxu0 %v1028
        %1329 = vmatpush1.bf16.msra.mxu0 %v1027
        %1330 = vmatprep.subr.bf16.mxu0 %v1044
        %1331 = vmatpush1.bf16.msra.mxu0 %v1043
        %1332 = vmatprep.subr.bf16.mxu0 0
        %1333 = vmatpush1.bf16.msra.mxu0 0
        %1334 = vmatprep.subr.bf16.mxu0 0
        %1335 = vmatpush1.bf16.msra.mxu0 0
        %1336 = vmatprep.subr.bf16.mxu0 0
        %1337 = vmatpush1.bf16.msra.mxu0 0
        %1338 = vmatprep.subr.bf16.mxu0 0
        %1339 = vmatpush1.bf16.msra.mxu0 0
        %1340 = vmatprep.subr.bf16.mxu0 0
        %1341 = vmatpush1.bf16.msra.mxu0 0
        %1342 = vmatprep.subr.bf16.mxu0 0
        %1343 = vmatpush1.bf16.msra.mxu0 0
        %1344 = vmatprep.subr.bf16.mxu0 0
        %1345 = vmatpush1.bf16.msra.mxu0 0
        %1346 = vmatprep.subr.bf16.mxu0 0
        %1347 = vmatpush1.bf16.msra.mxu0 0
        %1348 = vmatprep.subr.bf16.mxu0 0
        %1349 = vmatpush1.bf16.msra.mxu0 0
        %1350 = vmatprep.subr.bf16.mxu0 0
        %1351 = vmatpush1.bf16.msra.mxu0 0
        %1352 = vmatprep.subr.bf16.mxu0 0
        %1353 = vmatpush1.bf16.msra.mxu0 0
        %1354 = vmatprep.subr.bf16.mxu0 0
        %1355 = vmatpush1.bf16.msra.mxu0 0
        %1356 = vmatprep.subr.bf16.mxu0 0
        %1357 = vmatpush1.bf16.msra.mxu0 0
        %1358 = vmatprep.subr.bf16.mxu0 0
        %1359 = vmatpush1.bf16.msra.mxu0 0
        %1360 = vmatprep.mubr.bf16.mxu0 0
        %1361 = vmatmul.mubr.bf16.gmra.mrb[0].mxu0 %v1080
        %v1362 = vpop.f32.mrb[0].mxu0
        %v1363 = vadd.f32 %v890, %v1362
        %v1364 = vpop.f32.mrb[0].mxu0
        %v1365 = vadd.f32 %v894, %v1364
        %v1366 = vpop.f32.mrb[0].mxu0
        %v1367 = vpop.f32.mrb[0].mxu0
        %1368 = vdwg.mxu0
        %1369 = vmatprep.subr.bf16.mxu0 %v1030
        %1370 = vmatpush1.bf16.msra.mxu0 %v1029
        %1371 = vmatprep.subr.bf16.mxu0 %v1046
        %1372 = vmatpush1.bf16.msra.mxu0 %v1045
        %1373 = vmatprep.subr.bf16.mxu0 0
        %1374 = vmatpush1.bf16.msra.mxu0 0
        %1375 = vmatprep.subr.bf16.mxu0 0
        %1376 = vmatpush1.bf16.msra.mxu0 0
        %1377 = vmatprep.subr.bf16.mxu0 0
        %1378 = vmatpush1.bf16.msra.mxu0 0
        %1379 = vmatprep.subr.bf16.mxu0 0
        %1380 = vmatpush1.bf16.msra.mxu0 0
        %1381 = vmatprep.subr.bf16.mxu0 0
        %1382 = vmatpush1.bf16.msra.mxu0 0
        %1383 = vmatprep.subr.bf16.mxu0 0
        %1384 = vmatpush1.bf16.msra.mxu0 0
        %1385 = vmatprep.subr.bf16.mxu0 0
        %1386 = vmatpush1.bf16.msra.mxu0 0
        %1387 = vmatprep.subr.bf16.mxu0 0
        %1388 = vmatpush1.bf16.msra.mxu0 0
        %1389 = vmatprep.subr.bf16.mxu0 0
        %1390 = vmatpush1.bf16.msra.mxu0 0
        %1391 = vmatprep.subr.bf16.mxu0 0
        %1392 = vmatpush1.bf16.msra.mxu0 0
        %1393 = vmatprep.subr.bf16.mxu0 0
        %1394 = vmatpush1.bf16.msra.mxu0 0
        %1395 = vmatprep.subr.bf16.mxu0 0
        %1396 = vmatpush1.bf16.msra.mxu0 0
        %1397 = vmatprep.subr.bf16.mxu0 0
        %1398 = vmatpush1.bf16.msra.mxu0 0
        %1399 = vmatprep.subr.bf16.mxu0 0
        %1400 = vmatpush1.bf16.msra.mxu0 0
        %1401 = vmatprep.mubr.bf16.mxu0 0
        %1402 = vmatmul.mubr.bf16.gmra.mrb[0].mxu0 %v1080
        %v1403 = vpop.f32.mrb[0].mxu0
        %v1404 = vadd.f32 %v898, %v1403
        %v1405 = vpop.f32.mrb[0].mxu0
        %v1406 = vadd.f32 %v902, %v1405
        %v1407 = vpop.f32.mrb[0].mxu0
        %v1408 = vpop.f32.mrb[0].mxu0
        %1409 = vdwg.mxu0
        %v1410 = vmax.f32 %v1117, 0.0
        %v1411 = vmax.f32 %v1119, 0.0
        %v1412 = vmax.f32 %v1158, 0.0
        %v1413 = vmax.f32 %v1160, 0.0
        %v1414 = vmax.f32 %v1199, 0.0
        %v1415 = vmax.f32 %v1201, 0.0
        %v1416 = vmax.f32 %v1240, 0.0
        %v1417 = vmax.f32 %v1242, 0.0
        %v1418 = vmax.f32 %v1281, 0.0
        %v1419 = vmax.f32 %v1283, 0.0
        %v1420 = vmax.f32 %v1322, 0.0
        %v1421 = vmax.f32 %v1324, 0.0
        %v1422 = vmax.f32 %v1363, 0.0
        %v1423 = vmax.f32 %v1365, 0.0
        %v1424 = vmax.f32 %v1404, 0.0
        %v1425 = vmax.f32 %v1406, 0.0
        %v1426 = vpack.c.bf16 %v1410, %v1410
        %v1427 = vpack.c.bf16 %v1411, %v1411
        %v1428 = vpack.c.bf16 %v1412, %v1412
        %v1429 = vpack.c.bf16 %v1413, %v1413
        %v1430 = vpack.c.bf16 %v1414, %v1414
        %v1431 = vpack.c.bf16 %v1415, %v1415
        %v1432 = vpack.c.bf16 %v1416, %v1416
        %v1433 = vpack.c.bf16 %v1417, %v1417
        %v1434 = vpack.c.bf16 %v1418, %v1418
        %v1435 = vpack.c.bf16 %v1419, %v1419
        %v1436 = vpack.c.bf16 %v1420, %v1420
        %v1437 = vpack.c.bf16 %v1421, %v1421
        %v1438 = vpack.c.bf16 %v1422, %v1422
        %v1439 = vpack.c.bf16 %v1423, %v1423
        %v1440 = vpack.c.bf16 %v1424, %v1424
        %v1441 = vpack.c.bf16 %v1425, %v1425
        %v1442 = vld [vmem:[%s480] sm:$0xf]
        %v1443 = vld [vmem:[%s480 + $0x4] sm:$0xf]
        %v1444 = vld [vmem:[%s480 + $0x8] sm:$0xf]
        %v1445 = vld [vmem:[%s480 + $0xc] sm:$0xf]
        %v1446 = vld [vmem:[%s480 + $0x10] sm:$0xf]
        %v1447 = vld [vmem:[%s480 + $0x14] sm:$0xf]
        %v1448 = vld [vmem:[%s480 + $0x18] sm:$0xf]
        %v1449 = vld [vmem:[%s480 + $0x1c] sm:$0xf]
        %v1450 = vld [vmem:[%s480 + $0x20] sm:$0xf]
        %v1451 = vld [vmem:[%s480 + $0x24] sm:$0xf]
        %v1452 = vld [vmem:[%s480 + $0x28] sm:$0xf]
        %v1453 = vld [vmem:[%s480 + $0x2c] sm:$0xf]
        %v1454 = vld [vmem:[%s480 + $0x30] sm:$0xf]
        %v1455 = vld [vmem:[%s480 + $0x34] sm:$0xf]
        %v1456 = vld [vmem:[%s480 + $0x38] sm:$0xf]
        %v1457 = vld [vmem:[%s480 + $0x3c] sm:$0xf]
        %v1458 = vld [vmem:[%s480 + $0x40] sm:$0xf]
        %v1459 = vld [vmem:[%s480 + $0x44] sm:$0xf]
        %v1460 = vld [vmem:[%s480 + $0x48] sm:$0xf]
        %v1461 = vld [vmem:[%s480 + $0x4c] sm:$0xf]
        %v1462 = vld [vmem:[%s480 + $0x50] sm:$0xf]
        %v1463 = vld [vmem:[%s480 + $0x54] sm:$0xf]
        %v1464 = vld [vmem:[%s480 + $0x58] sm:$0xf]
        %v1465 = vld [vmem:[%s480 + $0x5c] sm:$0xf]
        %v1466 = vld [vmem:[%s480 + $0x60] sm:$0xf]
        %v1467 = vld [vmem:[%s480 + $0x64] sm:$0xf]
        %v1468 = vld [vmem:[%s480 + $0x68] sm:$0xf]
        %v1469 = vld [vmem:[%s480 + $0x6c] sm:$0xf]
        %v1470 = vld [vmem:[%s480 + $0x70] sm:$0xf]
        %v1471 = vld [vmem:[%s480 + $0x74] sm:$0xf]
        %v1472 = vld [vmem:[%s480 + $0x78] sm:$0xf]
        %v1473 = vld [vmem:[%s480 + $0x7c] sm:$0xf]
        %v1474 = vld [vmem:[%s480 + $0x80] sm:$0xf]
        %v1475 = vld [vmem:[%s480 + $0x84] sm:$0xf]
        %v1476 = vld [vmem:[%s480 + $0x88] sm:$0xf]
        %v1477 = vld [vmem:[%s480 + $0x8c] sm:$0xf]
        %v1478 = vld [vmem:[%s480 + $0x90] sm:$0xf]
        %v1479 = vld [vmem:[%s480 + $0x94] sm:$0xf]
        %v1480 = vld [vmem:[%s480 + $0x98] sm:$0xf]
        %v1481 = vld [vmem:[%s480 + $0x9c] sm:$0xf]
        %v1482 = vld [vmem:[%s480 + $0xa0] sm:$0xf]
        %v1483 = vld [vmem:[%s480 + $0xa4] sm:$0xf]
        %v1484 = vld [vmem:[%s480 + $0xa8] sm:$0xf]
        %v1485 = vld [vmem:[%s480 + $0xac] sm:$0xf]
        %v1486 = vld [vmem:[%s480 + $0xb0] sm:$0xf]
        %v1487 = vld [vmem:[%s480 + $0xb4] sm:$0xf]
        %v1488 = vld [vmem:[%s480 + $0xb8] sm:$0xf]
        %v1489 = vld [vmem:[%s480 + $0xbc] sm:$0xf]
        %v1490 = vld [vmem:[%s480 + $0xc0] sm:$0xf]
        %v1491 = vld [vmem:[%s480 + $0xc4] sm:$0xf]
        %v1492 = vld [vmem:[%s480 + $0xc8] sm:$0xf]
        %v1493 = vld [vmem:[%s480 + $0xcc] sm:$0xf]
        %v1494 = vld [vmem:[%s480 + $0xd0] sm:$0xf]
        %v1495 = vld [vmem:[%s480 + $0xd4] sm:$0xf]
        %v1496 = vld [vmem:[%s480 + $0xd8] sm:$0xf]
        %v1497 = vld [vmem:[%s480 + $0xdc] sm:$0xf]
        %v1498 = vld [vmem:[%s480 + $0xe0] sm:$0xf]
        %v1499 = vld [vmem:[%s480 + $0xe4] sm:$0xf]
        %v1500 = vld [vmem:[%s480 + $0xe8] sm:$0xf]
        %v1501 = vld [vmem:[%s480 + $0xec] sm:$0xf]
        %v1502 = vld [vmem:[%s480 + $0xf0] sm:$0xf]
        %v1503 = vld [vmem:[%s480 + $0xf4] sm:$0xf]
        %v1504 = vld [vmem:[%s480 + $0xf8] sm:$0xf]
        %v1505 = vld [vmem:[%s480 + $0xfc] sm:$0xf]
        %v1506 = vld [vmem:[%s480 + $0x100] sm:$0xf]
        %v1507 = vld [vmem:[%s480 + $0x104] sm:$0xf]
        %v1508 = vld [vmem:[%s480 + $0x108] sm:$0xf]
        %v1509 = vld [vmem:[%s480 + $0x10c] sm:$0xf]
        %v1510 = vld [vmem:[%s480 + $0x110] sm:$0xf]
        %v1511 = vld [vmem:[%s480 + $0x114] sm:$0xf]
        %v1512 = vld [vmem:[%s480 + $0x118] sm:$0xf]
        %v1513 = vld [vmem:[%s480 + $0x11c] sm:$0xf]
        %v1514 = vld [vmem:[%s480 + $0x120] sm:$0xf]
        %v1515 = vld [vmem:[%s480 + $0x124] sm:$0xf]
        %v1516 = vld [vmem:[%s480 + $0x128] sm:$0xf]
        %v1517 = vld [vmem:[%s480 + $0x12c] sm:$0xf]
        %v1518 = vld [vmem:[%s480 + $0x130] sm:$0xf]
        %v1519 = vld [vmem:[%s480 + $0x134] sm:$0xf]
        %v1520 = vld [vmem:[%s480 + $0x138] sm:$0xf]
        %v1521 = vld [vmem:[%s480 + $0x13c] sm:$0xf]
        %v1522 = vld [vmem:[%s480 + $0x140] sm:$0xf]
        %v1523 = vld [vmem:[%s480 + $0x144] sm:$0xf]
        %v1524 = vld [vmem:[%s480 + $0x148] sm:$0xf]
        %v1525 = vld [vmem:[%s480 + $0x14c] sm:$0xf]
        %v1526 = vld [vmem:[%s480 + $0x150] sm:$0xf]
        %v1527 = vld [vmem:[%s480 + $0x154] sm:$0xf]
        %v1528 = vld [vmem:[%s480 + $0x158] sm:$0xf]
        %v1529 = vld [vmem:[%s480 + $0x15c] sm:$0xf]
        %v1530 = vld [vmem:[%s480 + $0x160] sm:$0xf]
        %v1531 = vld [vmem:[%s480 + $0x164] sm:$0xf]
        %v1532 = vld [vmem:[%s480 + $0x168] sm:$0xf]
        %v1533 = vld [vmem:[%s480 + $0x16c] sm:$0xf]
        %v1534 = vld [vmem:[%s480 + $0x170] sm:$0xf]
        %v1535 = vld [vmem:[%s480 + $0x174] sm:$0xf]
        %v1536 = vld [vmem:[%s480 + $0x178] sm:$0xf]
        %v1537 = vld [vmem:[%s480 + $0x17c] sm:$0xf]
        %v1538 = vld [vmem:[%s480 + $0x180] sm:$0xf]
        %v1539 = vld [vmem:[%s480 + $0x184] sm:$0xf]
        %v1540 = vld [vmem:[%s480 + $0x188] sm:$0xf]
        %v1541 = vld [vmem:[%s480 + $0x18c] sm:$0xf]
        %v1542 = vld [vmem:[%s480 + $0x190] sm:$0xf]
        %v1543 = vld [vmem:[%s480 + $0x194] sm:$0xf]
        %v1544 = vld [vmem:[%s480 + $0x198] sm:$0xf]
        %v1545 = vld [vmem:[%s480 + $0x19c] sm:$0xf]
        %v1546 = vld [vmem:[%s480 + $0x1a0] sm:$0xf]
        %v1547 = vld [vmem:[%s480 + $0x1a4] sm:$0xf]
        %v1548 = vld [vmem:[%s480 + $0x1a8] sm:$0xf]
        %v1549 = vld [vmem:[%s480 + $0x1ac] sm:$0xf]
        %v1550 = vld [vmem:[%s480 + $0x1b0] sm:$0xf]
        %v1551 = vld [vmem:[%s480 + $0x1b4] sm:$0xf]
        %v1552 = vld [vmem:[%s480 + $0x1b8] sm:$0xf]
        %v1553 = vld [vmem:[%s480 + $0x1bc] sm:$0xf]
        %v1554 = vld [vmem:[%s480 + $0x1c0] sm:$0xf]
        %v1555 = vld [vmem:[%s480 + $0x1c4] sm:$0xf]
        %v1556 = vld [vmem:[%s480 + $0x1c8] sm:$0xf]
        %v1557 = vld [vmem:[%s480 + $0x1cc] sm:$0xf]
        %v1558 = vld [vmem:[%s480 + $0x1d0] sm:$0xf]
        %v1559 = vld [vmem:[%s480 + $0x1d4] sm:$0xf]
        %v1560 = vld [vmem:[%s480 + $0x1d8] sm:$0xf]
        %v1561 = vld [vmem:[%s480 + $0x1dc] sm:$0xf]
        %v1562 = vld [vmem:[%s480 + $0x1e0] sm:$0xf]
        %v1563 = vld [vmem:[%s480 + $0x1e4] sm:$0xf]
        %v1564 = vld [vmem:[%s480 + $0x1e8] sm:$0xf]
        %v1565 = vld [vmem:[%s480 + $0x1ec] sm:$0xf]
        %v1566 = vld [vmem:[%s480 + $0x1f0] sm:$0xf]
        %v1567 = vld [vmem:[%s480 + $0x1f4] sm:$0xf]
        %v1568 = vld [vmem:[%s480 + $0x1f8] sm:$0xf]
        %v1569 = vld [vmem:[%s480 + $0x1fc] sm:$0xf]
        %v1570 = vld [vmem:[%s480 + $0x200] sm:$0xf]
        %v1571 = vld [vmem:[%s480 + $0x204] sm:$0xf]
        %v1572 = vld [vmem:[%s480 + $0x208] sm:$0xf]
        %v1573 = vld [vmem:[%s480 + $0x20c] sm:$0xf]
        %v1574 = vld [vmem:[%s480 + $0x210] sm:$0xf]
        %v1575 = vld [vmem:[%s480 + $0x214] sm:$0xf]
        %v1576 = vld [vmem:[%s480 + $0x218] sm:$0xf]
        %v1577 = vld [vmem:[%s480 + $0x21c] sm:$0xf]
        %v1578 = vld [vmem:[%s480 + $0x220] sm:$0xf]
        %v1579 = vld [vmem:[%s480 + $0x224] sm:$0xf]
        %v1580 = vld [vmem:[%s480 + $0x228] sm:$0xf]
        %v1581 = vld [vmem:[%s480 + $0x22c] sm:$0xf]
        %v1582 = vld [vmem:[%s480 + $0x230] sm:$0xf]
        %v1583 = vld [vmem:[%s480 + $0x234] sm:$0xf]
        %v1584 = vld [vmem:[%s480 + $0x238] sm:$0xf]
        %v1585 = vld [vmem:[%s480 + $0x23c] sm:$0xf]
        %v1586 = vld [vmem:[%s480 + $0x240] sm:$0xf]
        %v1587 = vld [vmem:[%s480 + $0x244] sm:$0xf]
        %v1588 = vld [vmem:[%s480 + $0x248] sm:$0xf]
        %v1589 = vld [vmem:[%s480 + $0x24c] sm:$0xf]
        %v1590 = vld [vmem:[%s480 + $0x250] sm:$0xf]
        %v1591 = vld [vmem:[%s480 + $0x254] sm:$0xf]
        %v1592 = vld [vmem:[%s480 + $0x258] sm:$0xf]
        %v1593 = vld [vmem:[%s480 + $0x25c] sm:$0xf]
        %v1594 = vld [vmem:[%s480 + $0x260] sm:$0xf]
        %v1595 = vld [vmem:[%s480 + $0x264] sm:$0xf]
        %v1596 = vld [vmem:[%s480 + $0x268] sm:$0xf]
        %v1597 = vld [vmem:[%s480 + $0x26c] sm:$0xf]
        %v1598 = vld [vmem:[%s480 + $0x270] sm:$0xf]
        %v1599 = vld [vmem:[%s480 + $0x274] sm:$0xf]
        %v1600 = vld [vmem:[%s480 + $0x278] sm:$0xf]
        %v1601 = vld [vmem:[%s480 + $0x27c] sm:$0xf]
        %v1602 = vld [vmem:[%s480 + $0x280] sm:$0xf]
        %v1603 = vld [vmem:[%s480 + $0x284] sm:$0xf]
        %v1604 = vld [vmem:[%s480 + $0x288] sm:$0xf]
        %v1605 = vld [vmem:[%s480 + $0x28c] sm:$0xf]
        %v1606 = vld [vmem:[%s480 + $0x290] sm:$0xf]
        %v1607 = vld [vmem:[%s480 + $0x294] sm:$0xf]
        %v1608 = vld [vmem:[%s480 + $0x298] sm:$0xf]
        %v1609 = vld [vmem:[%s480 + $0x29c] sm:$0xf]
        %v1610 = vld [vmem:[%s480 + $0x2a0] sm:$0xf]
        %v1611 = vld [vmem:[%s480 + $0x2a4] sm:$0xf]
        %v1612 = vld [vmem:[%s480 + $0x2a8] sm:$0xf]
        %v1613 = vld [vmem:[%s480 + $0x2ac] sm:$0xf]
        %v1614 = vld [vmem:[%s480 + $0x2b0] sm:$0xf]
        %v1615 = vld [vmem:[%s480 + $0x2b4] sm:$0xf]
        %v1616 = vld [vmem:[%s480 + $0x2b8] sm:$0xf]
        %v1617 = vld [vmem:[%s480 + $0x2bc] sm:$0xf]
        %v1618 = vld [vmem:[%s480 + $0x2c0] sm:$0xf]
        %v1619 = vld [vmem:[%s480 + $0x2c4] sm:$0xf]
        %v1620 = vld [vmem:[%s480 + $0x2c8] sm:$0xf]
        %v1621 = vld [vmem:[%s480 + $0x2cc] sm:$0xf]
        %v1622 = vld [vmem:[%s480 + $0x2d0] sm:$0xf]
        %v1623 = vld [vmem:[%s480 + $0x2d4] sm:$0xf]
        %v1624 = vld [vmem:[%s480 + $0x2d8] sm:$0xf]
        %v1625 = vld [vmem:[%s480 + $0x2dc] sm:$0xf]
        %v1626 = vld [vmem:[%s480 + $0x2e0] sm:$0xf]
        %v1627 = vld [vmem:[%s480 + $0x2e4] sm:$0xf]
        %v1628 = vld [vmem:[%s480 + $0x2e8] sm:$0xf]
        %v1629 = vld [vmem:[%s480 + $0x2ec] sm:$0xf]
        %v1630 = vld [vmem:[%s480 + $0x2f0] sm:$0xf]
        %v1631 = vld [vmem:[%s480 + $0x2f4] sm:$0xf]
        %v1632 = vld [vmem:[%s480 + $0x2f8] sm:$0xf]
        %v1633 = vld [vmem:[%s480 + $0x2fc] sm:$0xf]
        %v1634 = vld [vmem:[%s480 + $0x300] sm:$0xf]
        %v1635 = vld [vmem:[%s480 + $0x304] sm:$0xf]
        %v1636 = vld [vmem:[%s480 + $0x308] sm:$0xf]
        %v1637 = vld [vmem:[%s480 + $0x30c] sm:$0xf]
        %v1638 = vld [vmem:[%s480 + $0x310] sm:$0xf]
        %v1639 = vld [vmem:[%s480 + $0x314] sm:$0xf]
        %v1640 = vld [vmem:[%s480 + $0x318] sm:$0xf]
        %v1641 = vld [vmem:[%s480 + $0x31c] sm:$0xf]
        %v1642 = vld [vmem:[%s480 + $0x320] sm:$0xf]
        %v1643 = vld [vmem:[%s480 + $0x324] sm:$0xf]
        %v1644 = vld [vmem:[%s480 + $0x328] sm:$0xf]
        %v1645 = vld [vmem:[%s480 + $0x32c] sm:$0xf]
        %v1646 = vld [vmem:[%s480 + $0x330] sm:$0xf]
        %v1647 = vld [vmem:[%s480 + $0x334] sm:$0xf]
        %v1648 = vld [vmem:[%s480 + $0x338] sm:$0xf]
        %v1649 = vld [vmem:[%s480 + $0x33c] sm:$0xf]
        %v1650 = vld [vmem:[%s480 + $0x340] sm:$0xf]
        %v1651 = vld [vmem:[%s480 + $0x344] sm:$0xf]
        %v1652 = vld [vmem:[%s480 + $0x348] sm:$0xf]
        %v1653 = vld [vmem:[%s480 + $0x34c] sm:$0xf]
        %v1654 = vld [vmem:[%s480 + $0x350] sm:$0xf]
        %v1655 = vld [vmem:[%s480 + $0x354] sm:$0xf]
        %v1656 = vld [vmem:[%s480 + $0x358] sm:$0xf]
        %v1657 = vld [vmem:[%s480 + $0x35c] sm:$0xf]
        %v1658 = vld [vmem:[%s480 + $0x360] sm:$0xf]
        %v1659 = vld [vmem:[%s480 + $0x364] sm:$0xf]
        %v1660 = vld [vmem:[%s480 + $0x368] sm:$0xf]
        %v1661 = vld [vmem:[%s480 + $0x36c] sm:$0xf]
        %v1662 = vld [vmem:[%s480 + $0x370] sm:$0xf]
        %v1663 = vld [vmem:[%s480 + $0x374] sm:$0xf]
        %v1664 = vld [vmem:[%s480 + $0x378] sm:$0xf]
        %v1665 = vld [vmem:[%s480 + $0x37c] sm:$0xf]
        %v1666 = vld [vmem:[%s480 + $0x380] sm:$0xf]
        %v1667 = vld [vmem:[%s480 + $0x384] sm:$0xf]
        %v1668 = vld [vmem:[%s480 + $0x388] sm:$0xf]
        %v1669 = vld [vmem:[%s480 + $0x38c] sm:$0xf]
        %v1670 = vld [vmem:[%s480 + $0x390] sm:$0xf]
        %v1671 = vld [vmem:[%s480 + $0x394] sm:$0xf]
        %v1672 = vld [vmem:[%s480 + $0x398] sm:$0xf]
        %v1673 = vld [vmem:[%s480 + $0x39c] sm:$0xf]
        %v1674 = vld [vmem:[%s480 + $0x3a0] sm:$0xf]
        %v1675 = vld [vmem:[%s480 + $0x3a4] sm:$0xf]
        %v1676 = vld [vmem:[%s480 + $0x3a8] sm:$0xf]
        %v1677 = vld [vmem:[%s480 + $0x3ac] sm:$0xf]
        %v1678 = vld [vmem:[%s480 + $0x3b0] sm:$0xf]
        %v1679 = vld [vmem:[%s480 + $0x3b4] sm:$0xf]
        %v1680 = vld [vmem:[%s480 + $0x3b8] sm:$0xf]
        %v1681 = vld [vmem:[%s480 + $0x3bc] sm:$0xf]
        %v1682 = vld [vmem:[%s480 + $0x3c0] sm:$0xf]
        %v1683 = vld [vmem:[%s480 + $0x3c4] sm:$0xf]
        %v1684 = vld [vmem:[%s480 + $0x3c8] sm:$0xf]
        %v1685 = vld [vmem:[%s480 + $0x3cc] sm:$0xf]
        %v1686 = vld [vmem:[%s480 + $0x3d0] sm:$0xf]
        %v1687 = vld [vmem:[%s480 + $0x3d4] sm:$0xf]
        %v1688 = vld [vmem:[%s480 + $0x3d8] sm:$0xf]
        %v1689 = vld [vmem:[%s480 + $0x3dc] sm:$0xf]
        %v1690 = vld [vmem:[%s480 + $0x3e0] sm:$0xf]
        %v1691 = vld [vmem:[%s480 + $0x3e4] sm:$0xf]
        %v1692 = vld [vmem:[%s480 + $0x3e8] sm:$0xf]
        %v1693 = vld [vmem:[%s480 + $0x3ec] sm:$0xf]
        %v1694 = vld [vmem:[%s480 + $0x3f0] sm:$0xf]
        %v1695 = vld [vmem:[%s480 + $0x3f4] sm:$0xf]
        %v1696 = vld [vmem:[%s480 + $0x3f8] sm:$0xf]
        %v1697 = vld [vmem:[%s480 + $0x3fc] sm:$0xf]
        %v1698 = vlaneseq
        %v1699 = vshrl.u32 %v1698, 7
        %v1700 = vsub.s32 2, %v1699
        %v1701 = vrot.slane %v646, %v1700
        %v1958 = vunpack.c.l.b16 %v1442
        %v1959 = vunpack.c.l.b16 %v1443
        %v1960 = vunpack.c.l.b16 %v1444
        %v1961 = vunpack.c.l.b16 %v1445
        %v1962 = vunpack.c.l.b16 %v1446
        %v1963 = vunpack.c.l.b16 %v1447
        %v1964 = vunpack.c.l.b16 %v1448
        %v1965 = vunpack.c.l.b16 %v1449
        %v1966 = vunpack.c.l.b16 %v1450
        %v1967 = vunpack.c.l.b16 %v1451
        %v1968 = vunpack.c.l.b16 %v1452
        %v1969 = vunpack.c.l.b16 %v1453
        %v1970 = vunpack.c.l.b16 %v1454
        %v1971 = vunpack.c.l.b16 %v1455
        %v1972 = vunpack.c.l.b16 %v1456
        %v1973 = vunpack.c.l.b16 %v1457
        %v1974 = vunpack.c.l.b16 %v1458
        %v1975 = vunpack.c.l.b16 %v1459
        %v1976 = vunpack.c.l.b16 %v1460
        %v1977 = vunpack.c.l.b16 %v1461
        %v1978 = vunpack.c.l.b16 %v1462
        %v1979 = vunpack.c.l.b16 %v1463
        %v1980 = vunpack.c.l.b16 %v1464
        %v1981 = vunpack.c.l.b16 %v1465
        %v1982 = vunpack.c.l.b16 %v1466
        %v1983 = vunpack.c.l.b16 %v1467
        %v1984 = vunpack.c.l.b16 %v1468
        %v1985 = vunpack.c.l.b16 %v1469
        %v1986 = vunpack.c.l.b16 %v1470
        %v1987 = vunpack.c.l.b16 %v1471
        %v1988 = vunpack.c.l.b16 %v1472
        %v1989 = vunpack.c.l.b16 %v1473
        %v1990 = vunpack.c.l.b16 %v1474
        %v1991 = vunpack.c.l.b16 %v1475
        %v1992 = vunpack.c.l.b16 %v1476
        %v1993 = vunpack.c.l.b16 %v1477
        %v1994 = vunpack.c.l.b16 %v1478
        %v1995 = vunpack.c.l.b16 %v1479
        %v1996 = vunpack.c.l.b16 %v1480
        %v1997 = vunpack.c.l.b16 %v1481
        %v1998 = vunpack.c.l.b16 %v1482
        %v1999 = vunpack.c.l.b16 %v1483
        %v2000 = vunpack.c.l.b16 %v1484
        %v2001 = vunpack.c.l.b16 %v1485
        %v2002 = vunpack.c.l.b16 %v1486
        %v2003 = vunpack.c.l.b16 %v1487
        %v2004 = vunpack.c.l.b16 %v1488
        %v2005 = vunpack.c.l.b16 %v1489
        %v2006 = vunpack.c.l.b16 %v1490
        %v2007 = vunpack.c.l.b16 %v1491
        %v2008 = vunpack.c.l.b16 %v1492
        %v2009 = vunpack.c.l.b16 %v1493
        %v2010 = vunpack.c.l.b16 %v1494
        %v2011 = vunpack.c.l.b16 %v1495
        %v2012 = vunpack.c.l.b16 %v1496
        %v2013 = vunpack.c.l.b16 %v1497
        %v2014 = vunpack.c.l.b16 %v1498
        %v2015 = vunpack.c.l.b16 %v1499
        %v2016 = vunpack.c.l.b16 %v1500
        %v2017 = vunpack.c.l.b16 %v1501
        %v2018 = vunpack.c.l.b16 %v1502
        %v2019 = vunpack.c.l.b16 %v1503
        %v2020 = vunpack.c.l.b16 %v1504
        %v2021 = vunpack.c.l.b16 %v1505
        %v2022 = vunpack.c.l.b16 %v1506
        %v2023 = vunpack.c.l.b16 %v1507
        %v2024 = vunpack.c.l.b16 %v1508
        %v2025 = vunpack.c.l.b16 %v1509
        %v2026 = vunpack.c.l.b16 %v1510
        %v2027 = vunpack.c.l.b16 %v1511
        %v2028 = vunpack.c.l.b16 %v1512
        %v2029 = vunpack.c.l.b16 %v1513
        %v2030 = vunpack.c.l.b16 %v1514
        %v2031 = vunpack.c.l.b16 %v1515
        %v2032 = vunpack.c.l.b16 %v1516
        %v2033 = vunpack.c.l.b16 %v1517
        %v2034 = vunpack.c.l.b16 %v1518
        %v2035 = vunpack.c.l.b16 %v1519
        %v2036 = vunpack.c.l.b16 %v1520
        %v2037 = vunpack.c.l.b16 %v1521
        %v2038 = vunpack.c.l.b16 %v1522
        %v2039 = vunpack.c.l.b16 %v1523
        %v2040 = vunpack.c.l.b16 %v1524
        %v2041 = vunpack.c.l.b16 %v1525
        %v2042 = vunpack.c.l.b16 %v1526
        %v2043 = vunpack.c.l.b16 %v1527
        %v2044 = vunpack.c.l.b16 %v1528
        %v2045 = vunpack.c.l.b16 %v1529
        %v2046 = vunpack.c.l.b16 %v1530
        %v2047 = vunpack.c.l.b16 %v1531
        %v2048 = vunpack.c.l.b16 %v1532
        %v2049 = vunpack.c.l.b16 %v1533
        %v2050 = vunpack.c.l.b16 %v1534
        %v2051 = vunpack.c.l.b16 %v1535
        %v2052 = vunpack.c.l.b16 %v1536
        %v2053 = vunpack.c.l.b16 %v1537
        %v2054 = vunpack.c.l.b16 %v1538
        %v2055 = vunpack.c.l.b16 %v1539
        %v2056 = vunpack.c.l.b16 %v1540
        %v2057 = vunpack.c.l.b16 %v1541
        %v2058 = vunpack.c.l.b16 %v1542
        %v2059 = vunpack.c.l.b16 %v1543
        %v2060 = vunpack.c.l.b16 %v1544
        %v2061 = vunpack.c.l.b16 %v1545
        %v2062 = vunpack.c.l.b16 %v1546
        %v2063 = vunpack.c.l.b16 %v1547
        %v2064 = vunpack.c.l.b16 %v1548
        %v2065 = vunpack.c.l.b16 %v1549
        %v2066 = vunpack.c.l.b16 %v1550
        %v2067 = vunpack.c.l.b16 %v1551
        %v2068 = vunpack.c.l.b16 %v1552
        %v2069 = vunpack.c.l.b16 %v1553
        %v2070 = vunpack.c.l.b16 %v1554
        %v2071 = vunpack.c.l.b16 %v1555
        %v2072 = vunpack.c.l.b16 %v1556
        %v2073 = vunpack.c.l.b16 %v1557
        %v2074 = vunpack.c.l.b16 %v1558
        %v2075 = vunpack.c.l.b16 %v1559
        %v2076 = vunpack.c.l.b16 %v1560
        %v2077 = vunpack.c.l.b16 %v1561
        %v2078 = vunpack.c.l.b16 %v1562
        %v2079 = vunpack.c.l.b16 %v1563
        %v2080 = vunpack.c.l.b16 %v1564
        %v2081 = vunpack.c.l.b16 %v1565
        %v2082 = vunpack.c.l.b16 %v1566
        %v2083 = vunpack.c.l.b16 %v1567
        %v2084 = vunpack.c.l.b16 %v1568
        %v2085 = vunpack.c.l.b16 %v1569
        %v2086 = vunpack.c.l.b16 %v1570
        %v2087 = vunpack.c.l.b16 %v1571
        %v2088 = vunpack.c.l.b16 %v1572
        %v2089 = vunpack.c.l.b16 %v1573
        %v2090 = vunpack.c.l.b16 %v1574
        %v2091 = vunpack.c.l.b16 %v1575
        %v2092 = vunpack.c.l.b16 %v1576
        %v2093 = vunpack.c.l.b16 %v1577
        %v2094 = vunpack.c.l.b16 %v1578
        %v2095 = vunpack.c.l.b16 %v1579
        %v2096 = vunpack.c.l.b16 %v1580
        %v2097 = vunpack.c.l.b16 %v1581
        %v2098 = vunpack.c.l.b16 %v1582
        %v2099 = vunpack.c.l.b16 %v1583
        %v2100 = vunpack.c.l.b16 %v1584
        %v2101 = vunpack.c.l.b16 %v1585
        %v2102 = vunpack.c.l.b16 %v1586
        %v2103 = vunpack.c.l.b16 %v1587
        %v2104 = vunpack.c.l.b16 %v1588
        %v2105 = vunpack.c.l.b16 %v1589
        %v2106 = vunpack.c.l.b16 %v1590
        %v2107 = vunpack.c.l.b16 %v1591
        %v2108 = vunpack.c.l.b16 %v1592
        %v2109 = vunpack.c.l.b16 %v1593
        %v2110 = vunpack.c.l.b16 %v1594
        %v2111 = vunpack.c.l.b16 %v1595
        %v2112 = vunpack.c.l.b16 %v1596
        %v2113 = vunpack.c.l.b16 %v1597
        %v2114 = vunpack.c.l.b16 %v1598
        %v2115 = vunpack.c.l.b16 %v1599
        %v2116 = vunpack.c.l.b16 %v1600
        %v2117 = vunpack.c.l.b16 %v1601
        %v2118 = vunpack.c.l.b16 %v1602
        %v2119 = vunpack.c.l.b16 %v1603
        %v2120 = vunpack.c.l.b16 %v1604
        %v2121 = vunpack.c.l.b16 %v1605
        %v2122 = vunpack.c.l.b16 %v1606
        %v2123 = vunpack.c.l.b16 %v1607
        %v2124 = vunpack.c.l.b16 %v1608
        %v2125 = vunpack.c.l.b16 %v1609
        %v2126 = vunpack.c.l.b16 %v1610
        %v2127 = vunpack.c.l.b16 %v1611
        %v2128 = vunpack.c.l.b16 %v1612
        %v2129 = vunpack.c.l.b16 %v1613
        %v2130 = vunpack.c.l.b16 %v1614
        %v2131 = vunpack.c.l.b16 %v1615
        %v2132 = vunpack.c.l.b16 %v1616
        %v2133 = vunpack.c.l.b16 %v1617
        %v2134 = vunpack.c.l.b16 %v1618
        %v2135 = vunpack.c.l.b16 %v1619
        %v2136 = vunpack.c.l.b16 %v1620
        %v2137 = vunpack.c.l.b16 %v1621
        %v2138 = vunpack.c.l.b16 %v1622
        %v2139 = vunpack.c.l.b16 %v1623
        %v2140 = vunpack.c.l.b16 %v1624
        %v2141 = vunpack.c.l.b16 %v1625
        %v2142 = vunpack.c.l.b16 %v1626
        %v2143 = vunpack.c.l.b16 %v1627
        %v2144 = vunpack.c.l.b16 %v1628
        %v2145 = vunpack.c.l.b16 %v1629
        %v2146 = vunpack.c.l.b16 %v1630
        %v2147 = vunpack.c.l.b16 %v1631
        %v2148 = vunpack.c.l.b16 %v1632
        %v2149 = vunpack.c.l.b16 %v1633
        %v2150 = vunpack.c.l.b16 %v1634
        %v2151 = vunpack.c.l.b16 %v1635
        %v2152 = vunpack.c.l.b16 %v1636
        %v2153 = vunpack.c.l.b16 %v1637
        %v2154 = vunpack.c.l.b16 %v1638
        %v2155 = vunpack.c.l.b16 %v1639
        %v2156 = vunpack.c.l.b16 %v1640
        %v2157 = vunpack.c.l.b16 %v1641
        %v2158 = vunpack.c.l.b16 %v1642
        %v2159 = vunpack.c.l.b16 %v1643
        %v2160 = vunpack.c.l.b16 %v1644
        %v2161 = vunpack.c.l.b16 %v1645
        %v2162 = vunpack.c.l.b16 %v1646
        %v2163 = vunpack.c.l.b16 %v1647
        %v2164 = vunpack.c.l.b16 %v1648
        %v2165 = vunpack.c.l.b16 %v1649
        %v2166 = vunpack.c.l.b16 %v1650
        %v2167 = vunpack.c.l.b16 %v1651
        %v2168 = vunpack.c.l.b16 %v1652
        %v2169 = vunpack.c.l.b16 %v1653
        %v2170 = vunpack.c.l.b16 %v1654
        %v2171 = vunpack.c.l.b16 %v1655
        %v2172 = vunpack.c.l.b16 %v1656
        %v2173 = vunpack.c.l.b16 %v1657
        %v2174 = vunpack.c.l.b16 %v1658
        %v2175 = vunpack.c.l.b16 %v1659
        %v2176 = vunpack.c.l.b16 %v1660
        %v2177 = vunpack.c.l.b16 %v1661
        %v2178 = vunpack.c.l.b16 %v1662
        %v2179 = vunpack.c.l.b16 %v1663
        %v2180 = vunpack.c.l.b16 %v1664
        %v2181 = vunpack.c.l.b16 %v1665
        %v2182 = vunpack.c.l.b16 %v1666
        %v2183 = vunpack.c.l.b16 %v1667
        %v2184 = vunpack.c.l.b16 %v1668
        %v2185 = vunpack.c.l.b16 %v1669
        %v2186 = vunpack.c.l.b16 %v1670
        %v2187 = vunpack.c.l.b16 %v1671
        %v2188 = vunpack.c.l.b16 %v1672
        %v2189 = vunpack.c.l.b16 %v1673
        %v2190 = vunpack.c.l.b16 %v1674
        %v2191 = vunpack.c.l.b16 %v1675
        %v2192 = vunpack.c.l.b16 %v1676
        %v2193 = vunpack.c.l.b16 %v1677
        %v2194 = vunpack.c.l.b16 %v1678
        %v2195 = vunpack.c.l.b16 %v1679
        %v2196 = vunpack.c.l.b16 %v1680
        %v2197 = vunpack.c.l.b16 %v1681
        %v2198 = vunpack.c.l.b16 %v1682
        %v2199 = vunpack.c.l.b16 %v1683
        %v2200 = vunpack.c.l.b16 %v1684
        %v2201 = vunpack.c.l.b16 %v1685
        %v2202 = vunpack.c.l.b16 %v1686
        %v2203 = vunpack.c.l.b16 %v1687
        %v2204 = vunpack.c.l.b16 %v1688
        %v2205 = vunpack.c.l.b16 %v1689
        %v2206 = vunpack.c.l.b16 %v1690
        %v2207 = vunpack.c.l.b16 %v1691
        %v2208 = vunpack.c.l.b16 %v1692
        %v2209 = vunpack.c.l.b16 %v1693
        %v2210 = vunpack.c.l.b16 %v1694
        %v2211 = vunpack.c.l.b16 %v1695
        %v2212 = vunpack.c.l.b16 %v1696
        %v2213 = vunpack.c.l.b16 %v1697
        %v2214 = vpack.c.b16 %v1959, %v1958
        %v2215 = vpack.c.b16 %v1961, %v1960
        %v2216 = vpack.c.b16 %v1963, %v1962
        %v2217 = vpack.c.b16 %v1965, %v1964
        %v2218 = vpack.c.b16 %v1967, %v1966
        %v2219 = vpack.c.b16 %v1969, %v1968
        %v2220 = vpack.c.b16 %v1971, %v1970
        %v2221 = vpack.c.b16 %v1973, %v1972
        %v2222 = vpack.c.b16 %v1975, %v1974
        %v2223 = vpack.c.b16 %v1977, %v1976
        %v2224 = vpack.c.b16 %v1979, %v1978
        %v2225 = vpack.c.b16 %v1981, %v1980
        %v2226 = vpack.c.b16 %v1983, %v1982
        %v2227 = vpack.c.b16 %v1985, %v1984
        %v2228 = vpack.c.b16 %v1987, %v1986
        %v2229 = vpack.c.b16 %v1989, %v1988
        %v2230 = vpack.c.b16 %v1991, %v1990
        %v2231 = vpack.c.b16 %v1993, %v1992
        %v2232 = vpack.c.b16 %v1995, %v1994
        %v2233 = vpack.c.b16 %v1997, %v1996
        %v2234 = vpack.c.b16 %v1999, %v1998
        %v2235 = vpack.c.b16 %v2001, %v2000
        %v2236 = vpack.c.b16 %v2003, %v2002
        %v2237 = vpack.c.b16 %v2005, %v2004
        %v2238 = vpack.c.b16 %v2007, %v2006
        %v2239 = vpack.c.b16 %v2009, %v2008
        %v2240 = vpack.c.b16 %v2011, %v2010
        %v2241 = vpack.c.b16 %v2013, %v2012
        %v2242 = vpack.c.b16 %v2015, %v2014
        %v2243 = vpack.c.b16 %v2017, %v2016
        %v2244 = vpack.c.b16 %v2019, %v2018
        %v2245 = vpack.c.b16 %v2021, %v2020
        %v2246 = vpack.c.b16 %v2023, %v2022
        %v2247 = vpack.c.b16 %v2025, %v2024
        %v2248 = vpack.c.b16 %v2027, %v2026
        %v2249 = vpack.c.b16 %v2029, %v2028
        %v2250 = vpack.c.b16 %v2031, %v2030
        %v2251 = vpack.c.b16 %v2033, %v2032
        %v2252 = vpack.c.b16 %v2035, %v2034
        %v2253 = vpack.c.b16 %v2037, %v2036
        %v2254 = vpack.c.b16 %v2039, %v2038
        %v2255 = vpack.c.b16 %v2041, %v2040
        %v2256 = vpack.c.b16 %v2043, %v2042
        %v2257 = vpack.c.b16 %v2045, %v2044
        %v2258 = vpack.c.b16 %v2047, %v2046
        %v2259 = vpack.c.b16 %v2049, %v2048
        %v2260 = vpack.c.b16 %v2051, %v2050
        %v2261 = vpack.c.b16 %v2053, %v2052
        %v2262 = vpack.c.b16 %v2055, %v2054
        %v2263 = vpack.c.b16 %v2057, %v2056
        %v2264 = vpack.c.b16 %v2059, %v2058
        %v2265 = vpack.c.b16 %v2061, %v2060
        %v2266 = vpack.c.b16 %v2063, %v2062
        %v2267 = vpack.c.b16 %v2065, %v2064
        %v2268 = vpack.c.b16 %v2067, %v2066
        %v2269 = vpack.c.b16 %v2069, %v2068
        %v2270 = vpack.c.b16 %v2071, %v2070
        %v2271 = vpack.c.b16 %v2073, %v2072
        %v2272 = vpack.c.b16 %v2075, %v2074
        %v2273 = vpack.c.b16 %v2077, %v2076
        %v2274 = vpack.c.b16 %v2079, %v2078
        %v2275 = vpack.c.b16 %v2081, %v2080
        %v2276 = vpack.c.b16 %v2083, %v2082
        %v2277 = vpack.c.b16 %v2085, %v2084
        %v2278 = vpack.c.b16 %v2087, %v2086
        %v2279 = vpack.c.b16 %v2089, %v2088
        %v2280 = vpack.c.b16 %v2091, %v2090
        %v2281 = vpack.c.b16 %v2093, %v2092
        %v2282 = vpack.c.b16 %v2095, %v2094
        %v2283 = vpack.c.b16 %v2097, %v2096
        %v2284 = vpack.c.b16 %v2099, %v2098
        %v2285 = vpack.c.b16 %v2101, %v2100
        %v2286 = vpack.c.b16 %v2103, %v2102
        %v2287 = vpack.c.b16 %v2105, %v2104
        %v2288 = vpack.c.b16 %v2107, %v2106
        %v2289 = vpack.c.b16 %v2109, %v2108
        %v2290 = vpack.c.b16 %v2111, %v2110
        %v2291 = vpack.c.b16 %v2113, %v2112
        %v2292 = vpack.c.b16 %v2115, %v2114
        %v2293 = vpack.c.b16 %v2117, %v2116
        %v2294 = vpack.c.b16 %v2119, %v2118
        %v2295 = vpack.c.b16 %v2121, %v2120
        %v2296 = vpack.c.b16 %v2123, %v2122
        %v2297 = vpack.c.b16 %v2125, %v2124
        %v2298 = vpack.c.b16 %v2127, %v2126
        %v2299 = vpack.c.b16 %v2129, %v2128
        %v2300 = vpack.c.b16 %v2131, %v2130
        %v2301 = vpack.c.b16 %v2133, %v2132
        %v2302 = vpack.c.b16 %v2135, %v2134
        %v2303 = vpack.c.b16 %v2137, %v2136
        %v2304 = vpack.c.b16 %v2139, %v2138
        %v2305 = vpack.c.b16 %v2141, %v2140
        %v2306 = vpack.c.b16 %v2143, %v2142
        %v2307 = vpack.c.b16 %v2145, %v2144
        %v2308 = vpack.c.b16 %v2147, %v2146
        %v2309 = vpack.c.b16 %v2149, %v2148
        %v2310 = vpack.c.b16 %v2151, %v2150
        %v2311 = vpack.c.b16 %v2153, %v2152
        %v2312 = vpack.c.b16 %v2155, %v2154
        %v2313 = vpack.c.b16 %v2157, %v2156
        %v2314 = vpack.c.b16 %v2159, %v2158
        %v2315 = vpack.c.b16 %v2161, %v2160
        %v2316 = vpack.c.b16 %v2163, %v2162
        %v2317 = vpack.c.b16 %v2165, %v2164
        %v2318 = vpack.c.b16 %v2167, %v2166
        %v2319 = vpack.c.b16 %v2169, %v2168
        %v2320 = vpack.c.b16 %v2171, %v2170
        %v2321 = vpack.c.b16 %v2173, %v2172
        %v2322 = vpack.c.b16 %v2175, %v2174
        %v2323 = vpack.c.b16 %v2177, %v2176
        %v2324 = vpack.c.b16 %v2179, %v2178
        %v2325 = vpack.c.b16 %v2181, %v2180
        %v2326 = vpack.c.b16 %v2183, %v2182
        %v2327 = vpack.c.b16 %v2185, %v2184
        %v2328 = vpack.c.b16 %v2187, %v2186
        %v2329 = vpack.c.b16 %v2189, %v2188
        %v2330 = vpack.c.b16 %v2191, %v2190
        %v2331 = vpack.c.b16 %v2193, %v2192
        %v2332 = vpack.c.b16 %v2195, %v2194
        %v2333 = vpack.c.b16 %v2197, %v2196
        %v2334 = vpack.c.b16 %v2199, %v2198
        %v2335 = vpack.c.b16 %v2201, %v2200
        %v2336 = vpack.c.b16 %v2203, %v2202
        %v2337 = vpack.c.b16 %v2205, %v2204
        %v2338 = vpack.c.b16 %v2207, %v2206
        %v2339 = vpack.c.b16 %v2209, %v2208
        %v2340 = vpack.c.b16 %v2211, %v2210
        %v2341 = vpack.c.b16 %v2213, %v2212
        %2470 = vmatprep.subr.bf16.mxu0 0
        %2471 = vmatpush1.bf16.msra.mxu0 %v2214
        %2472 = vmatprep.subr.bf16.mxu0 0
        %2473 = vmatpush1.bf16.msra.mxu0 %v2215
        %2474 = vmatprep.subr.bf16.mxu0 0
        %2475 = vmatpush1.bf16.msra.mxu0 %v2216
        %2476 = vmatprep.subr.bf16.mxu0 0
        %2477 = vmatpush1.bf16.msra.mxu0 %v2217
        %2478 = vmatprep.subr.bf16.mxu0 0
        %2479 = vmatpush1.bf16.msra.mxu0 %v2218
        %2480 = vmatprep.subr.bf16.mxu0 0
        %2481 = vmatpush1.bf16.msra.mxu0 %v2219
        %2482 = vmatprep.subr.bf16.mxu0 0
        %2483 = vmatpush1.bf16.msra.mxu0 %v2220
        %2484 = vmatprep.subr.bf16.mxu0 0
        %2485 = vmatpush1.bf16.msra.mxu0 %v2221
        %2486 = vmatprep.subr.bf16.mxu0 0
        %2487 = vmatpush1.bf16.msra.mxu0 %v2222
        %2488 = vmatprep.subr.bf16.mxu0 0
        %2489 = vmatpush1.bf16.msra.mxu0 %v2223
        %2490 = vmatprep.subr.bf16.mxu0 0
        %2491 = vmatpush1.bf16.msra.mxu0 %v2224
        %2492 = vmatprep.subr.bf16.mxu0 0
        %2493 = vmatpush1.bf16.msra.mxu0 %v2225
        %2494 = vmatprep.subr.bf16.mxu0 0
        %2495 = vmatpush1.bf16.msra.mxu0 %v2226
        %2496 = vmatprep.subr.bf16.mxu0 0
        %2497 = vmatpush1.bf16.msra.mxu0 %v2227
        %2498 = vmatprep.subr.bf16.mxu0 0
        %2499 = vmatpush1.bf16.msra.mxu0 %v2228
        %2500 = vmatprep.subr.bf16.mxu0 0
        %2501 = vmatpush1.bf16.msra.mxu0 %v2229
        %2502 = vmatprep.mubr.bf16.mxu0 %v1427
        %2503 = vmatmul.mubr.bf16.gmra.mrb[0].mxu0 %v1426
        %v2504 = vpop.f32.mrb[0].mxu0
        %v2505 = vadd.f32 %v1701, %v2504
        %v2506 = vpop.f32.mrb[0].mxu0
        %v2507 = vpop.f32.mrb[0].mxu0
        %v2508 = vpop.f32.mrb[0].mxu0
        %2509 = vdwg.mxu0
        %2510 = vmatprep.subr.bf16.mxu0 0
        %2511 = vmatpush1.bf16.msra.mxu0 %v2230
        %2512 = vmatprep.subr.bf16.mxu0 0
        %2513 = vmatpush1.bf16.msra.mxu0 %v2231
        %2514 = vmatprep.subr.bf16.mxu0 0
        %2515 = vmatpush1.bf16.msra.mxu0 %v2232
        %2516 = vmatprep.subr.bf16.mxu0 0
        %2517 = vmatpush1.bf16.msra.mxu0 %v2233
        %2518 = vmatprep.subr.bf16.mxu0 0
        %2519 = vmatpush1.bf16.msra.mxu0 %v2234
        %2520 = vmatprep.subr.bf16.mxu0 0
        %2521 = vmatpush1.bf16.msra.mxu0 %v2235
        %2522 = vmatprep.subr.bf16.mxu0 0
        %2523 = vmatpush1.bf16.msra.mxu0 %v2236
        %2524 = vmatprep.subr.bf16.mxu0 0
        %2525 = vmatpush1.bf16.msra.mxu0 %v2237
        %2526 = vmatprep.subr.bf16.mxu0 0
        %2527 = vmatpush1.bf16.msra.mxu0 %v2238
        %2528 = vmatprep.subr.bf16.mxu0 0
        %2529 = vmatpush1.bf16.msra.mxu0 %v2239
        %2530 = vmatprep.subr.bf16.mxu0 0
        %2531 = vmatpush1.bf16.msra.mxu0 %v2240
        %2532 = vmatprep.subr.bf16.mxu0 0
        %2533 = vmatpush1.bf16.msra.mxu0 %v2241
        %2534 = vmatprep.subr.bf16.mxu0 0
        %2535 = vmatpush1.bf16.msra.mxu0 %v2242
        %2536 = vmatprep.subr.bf16.mxu0 0
        %2537 = vmatpush1.bf16.msra.mxu0 %v2243
        %2538 = vmatprep.subr.bf16.mxu0 0
        %2539 = vmatpush1.bf16.msra.mxu0 %v2244
        %2540 = vmatprep.subr.bf16.mxu0 0
        %2541 = vmatpush1.bf16.msra.mxu0 %v2245
        %2542 = vmatprep.mubr.bf16.mxu0 %v1429
        %2543 = vmatmul.mubr.bf16.gmra.mrb[0].mxu0 %v1428
        %v2544 = vpop.f32.mrb[0].mxu0
        %v2545 = vadd.f32 %v2505, %v2544
        %v2546 = vpop.f32.mrb[0].mxu0
        %v2547 = vpop.f32.mrb[0].mxu0
        %v2548 = vpop.f32.mrb[0].mxu0
        %2549 = vdwg.mxu0
        %2550 = vmatprep.subr.bf16.mxu0 0
        %2551 = vmatpush1.bf16.msra.mxu0 %v2246
        %2552 = vmatprep.subr.bf16.mxu0 0
        %2553 = vmatpush1.bf16.msra.mxu0 %v2247
        %2554 = vmatprep.subr.bf16.mxu0 0
        %2555 = vmatpush1.bf16.msra.mxu0 %v2248
        %2556 = vmatprep.subr.bf16.mxu0 0
        %2557 = vmatpush1.bf16.msra.mxu0 %v2249
        %2558 = vmatprep.subr.bf16.mxu0 0
        %2559 = vmatpush1.bf16.msra.mxu0 %v2250
        %2560 = vmatprep.subr.bf16.mxu0 0
        %2561 = vmatpush1.bf16.msra.mxu0 %v2251
        %2562 = vmatprep.subr.bf16.mxu0 0
        %2563 = vmatpush1.bf16.msra.mxu0 %v2252
        %2564 = vmatprep.subr.bf16.mxu0 0
        %2565 = vmatpush1.bf16.msra.mxu0 %v2253
        %2566 = vmatprep.subr.bf16.mxu0 0
        %2567 = vmatpush1.bf16.msra.mxu0 %v2254
        %2568 = vmatprep.subr.bf16.mxu0 0
        %2569 = vmatpush1.bf16.msra.mxu0 %v2255
        %2570 = vmatprep.subr.bf16.mxu0 0
        %2571 = vmatpush1.bf16.msra.mxu0 %v2256
        %2572 = vmatprep.subr.bf16.mxu0 0
        %2573 = vmatpush1.bf16.msra.mxu0 %v2257
        %2574 = vmatprep.subr.bf16.mxu0 0
        %2575 = vmatpush1.bf16.msra.mxu0 %v2258
        %2576 = vmatprep.subr.bf16.mxu0 0
        %2577 = vmatpush1.bf16.msra.mxu0 %v2259
        %2578 = vmatprep.subr.bf16.mxu0 0
        %2579 = vmatpush1.bf16.msra.mxu0 %v2260
        %2580 = vmatprep.subr.bf16.mxu0 0
        %2581 = vmatpush1.bf16.msra.mxu0 %v2261
        %2582 = vmatprep.mubr.bf16.mxu0 %v1431
        %2583 = vmatmul.mubr.bf16.gmra.mrb[0].mxu0 %v1430
        %v2584 = vpop.f32.mrb[0].mxu0
        %v2585 = vadd.f32 %v2545, %v2584
        %v2586 = vpop.f32.mrb[0].mxu0
        %v2587 = vpop.f32.mrb[0].mxu0
        %v2588 = vpop.f32.mrb[0].mxu0
        %2589 = vdwg.mxu0
        %2590 = vmatprep.subr.bf16.mxu0 0
        %2591 = vmatpush1.bf16.msra.mxu0 %v2262
        %2592 = vmatprep.subr.bf16.mxu0 0
        %2593 = vmatpush1.bf16.msra.mxu0 %v2263
        %2594 = vmatprep.subr.bf16.mxu0 0
        %2595 = vmatpush1.bf16.msra.mxu0 %v2264
        %2596 = vmatprep.subr.bf16.mxu0 0
        %2597 = vmatpush1.bf16.msra.mxu0 %v2265
        %2598 = vmatprep.subr.bf16.mxu0 0
        %2599 = vmatpush1.bf16.msra.mxu0 %v2266
        %2600 = vmatprep.subr.bf16.mxu0 0
        %2601 = vmatpush1.bf16.msra.mxu0 %v2267
        %2602 = vmatprep.subr.bf16.mxu0 0
        %2603 = vmatpush1.bf16.msra.mxu0 %v2268
        %2604 = vmatprep.subr.bf16.mxu0 0
        %2605 = vmatpush1.bf16.msra.mxu0 %v2269
        %2606 = vmatprep.subr.bf16.mxu0 0
        %2607 = vmatpush1.bf16.msra.mxu0 %v2270
        %2608 = vmatprep.subr.bf16.mxu0 0
        %2609 = vmatpush1.bf16.msra.mxu0 %v2271
        %2610 = vmatprep.subr.bf16.mxu0 0
        %2611 = vmatpush1.bf16.msra.mxu0 %v2272
        %2612 = vmatprep.subr.bf16.mxu0 0
        %2613 = vmatpush1.bf16.msra.mxu0 %v2273
        %2614 = vmatprep.subr.bf16.mxu0 0
        %2615 = vmatpush1.bf16.msra.mxu0 %v2274
        %2616 = vmatprep.subr.bf16.mxu0 0
        %2617 = vmatpush1.bf16.msra.mxu0 %v2275
        %2618 = vmatprep.subr.bf16.mxu0 0
        %2619 = vmatpush1.bf16.msra.mxu0 %v2276
        %2620 = vmatprep.subr.bf16.mxu0 0
        %2621 = vmatpush1.bf16.msra.mxu0 %v2277
        %2622 = vmatprep.mubr.bf16.mxu0 %v1433
        %2623 = vmatmul.mubr.bf16.gmra.mrb[0].mxu0 %v1432
        %v2624 = vpop.f32.mrb[0].mxu0
        %v2625 = vadd.f32 %v2585, %v2624
        %v2626 = vpop.f32.mrb[0].mxu0
        %v2627 = vpop.f32.mrb[0].mxu0
        %v2628 = vpop.f32.mrb[0].mxu0
        %2629 = vdwg.mxu0
        %2630 = vmatprep.subr.bf16.mxu0 0
        %2631 = vmatpush1.bf16.msra.mxu0 %v2278
        %2632 = vmatprep.subr.bf16.mxu0 0
        %2633 = vmatpush1.bf16.msra.mxu0 %v2279
        %2634 = vmatprep.subr.bf16.mxu0 0
        %2635 = vmatpush1.bf16.msra.mxu0 %v2280
        %2636 = vmatprep.subr.bf16.mxu0 0
        %2637 = vmatpush1.bf16.msra.mxu0 %v2281
        %2638 = vmatprep.subr.bf16.mxu0 0
        %2639 = vmatpush1.bf16.msra.mxu0 %v2282
        %2640 = vmatprep.subr.bf16.mxu0 0
        %2641 = vmatpush1.bf16.msra.mxu0 %v2283
        %2642 = vmatprep.subr.bf16.mxu0 0
        %2643 = vmatpush1.bf16.msra.mxu0 %v2284
        %2644 = vmatprep.subr.bf16.mxu0 0
        %2645 = vmatpush1.bf16.msra.mxu0 %v2285
        %2646 = vmatprep.subr.bf16.mxu0 0
        %2647 = vmatpush1.bf16.msra.mxu0 %v2286
        %2648 = vmatprep.subr.bf16.mxu0 0
        %2649 = vmatpush1.bf16.msra.mxu0 %v2287
        %2650 = vmatprep.subr.bf16.mxu0 0
        %2651 = vmatpush1.bf16.msra.mxu0 %v2288
        %2652 = vmatprep.subr.bf16.mxu0 0
        %2653 = vmatpush1.bf16.msra.mxu0 %v2289
        %2654 = vmatprep.subr.bf16.mxu0 0
        %2655 = vmatpush1.bf16.msra.mxu0 %v2290
        %2656 = vmatprep.subr.bf16.mxu0 0
        %2657 = vmatpush1.bf16.msra.mxu0 %v2291
        %2658 = vmatprep.subr.bf16.mxu0 0
        %2659 = vmatpush1.bf16.msra.mxu0 %v2292
        %2660 = vmatprep.subr.bf16.mxu0 0
        %2661 = vmatpush1.bf16.msra.mxu0 %v2293
        %2662 = vmatprep.mubr.bf16.mxu0 %v1435
        %2663 = vmatmul.mubr.bf16.gmra.mrb[0].mxu0 %v1434
        %v2664 = vpop.f32.mrb[0].mxu0
        %v2665 = vadd.f32 %v2625, %v2664
        %v2666 = vpop.f32.mrb[0].mxu0
        %v2667 = vpop.f32.mrb[0].mxu0
        %v2668 = vpop.f32.mrb[0].mxu0
        %2669 = vdwg.mxu0
        %2670 = vmatprep.subr.bf16.mxu0 0
        %2671 = vmatpush1.bf16.msra.mxu0 %v2294
        %2672 = vmatprep.subr.bf16.mxu0 0
        %2673 = vmatpush1.bf16.msra.mxu0 %v2295
        %2674 = vmatprep.subr.bf16.mxu0 0
        %2675 = vmatpush1.bf16.msra.mxu0 %v2296
        %2676 = vmatprep.subr.bf16.mxu0 0
        %2677 = vmatpush1.bf16.msra.mxu0 %v2297
        %2678 = vmatprep.subr.bf16.mxu0 0
        %2679 = vmatpush1.bf16.msra.mxu0 %v2298
        %2680 = vmatprep.subr.bf16.mxu0 0
        %2681 = vmatpush1.bf16.msra.mxu0 %v2299
        %2682 = vmatprep.subr.bf16.mxu0 0
        %2683 = vmatpush1.bf16.msra.mxu0 %v2300
        %2684 = vmatprep.subr.bf16.mxu0 0
        %2685 = vmatpush1.bf16.msra.mxu0 %v2301
        %2686 = vmatprep.subr.bf16.mxu0 0
        %2687 = vmatpush1.bf16.msra.mxu0 %v2302
        %2688 = vmatprep.subr.bf16.mxu0 0
        %2689 = vmatpush1.bf16.msra.mxu0 %v2303
        %2690 = vmatprep.subr.bf16.mxu0 0
        %2691 = vmatpush1.bf16.msra.mxu0 %v2304
        %2692 = vmatprep.subr.bf16.mxu0 0
        %2693 = vmatpush1.bf16.msra.mxu0 %v2305
        %2694 = vmatprep.subr.bf16.mxu0 0
        %2695 = vmatpush1.bf16.msra.mxu0 %v2306
        %2696 = vmatprep.subr.bf16.mxu0 0
        %2697 = vmatpush1.bf16.msra.mxu0 %v2307
        %2698 = vmatprep.subr.bf16.mxu0 0
        %2699 = vmatpush1.bf16.msra.mxu0 %v2308
        %2700 = vmatprep.subr.bf16.mxu0 0
        %2701 = vmatpush1.bf16.msra.mxu0 %v2309
        %2702 = vmatprep.mubr.bf16.mxu0 %v1437
        %2703 = vmatmul.mubr.bf16.gmra.mrb[0].mxu0 %v1436
        %v2704 = vpop.f32.mrb[0].mxu0
        %v2705 = vadd.f32 %v2665, %v2704
        %v2706 = vpop.f32.mrb[0].mxu0
        %v2707 = vpop.f32.mrb[0].mxu0
        %v2708 = vpop.f32.mrb[0].mxu0
        %2709 = vdwg.mxu0
        %2710 = vmatprep.subr.bf16.mxu0 0
        %2711 = vmatpush1.bf16.msra.mxu0 %v2310
        %2712 = vmatprep.subr.bf16.mxu0 0
        %2713 = vmatpush1.bf16.msra.mxu0 %v2311
        %2714 = vmatprep.subr.bf16.mxu0 0
        %2715 = vmatpush1.bf16.msra.mxu0 %v2312
        %2716 = vmatprep.subr.bf16.mxu0 0
        %2717 = vmatpush1.bf16.msra.mxu0 %v2313
        %2718 = vmatprep.subr.bf16.mxu0 0
        %2719 = vmatpush1.bf16.msra.mxu0 %v2314
        %2720 = vmatprep.subr.bf16.mxu0 0
        %2721 = vmatpush1.bf16.msra.mxu0 %v2315
        %2722 = vmatprep.subr.bf16.mxu0 0
        %2723 = vmatpush1.bf16.msra.mxu0 %v2316
        %2724 = vmatprep.subr.bf16.mxu0 0
        %2725 = vmatpush1.bf16.msra.mxu0 %v2317
        %2726 = vmatprep.subr.bf16.mxu0 0
        %2727 = vmatpush1.bf16.msra.mxu0 %v2318
        %2728 = vmatprep.subr.bf16.mxu0 0
        %2729 = vmatpush1.bf16.msra.mxu0 %v2319
        %2730 = vmatprep.subr.bf16.mxu0 0
        %2731 = vmatpush1.bf16.msra.mxu0 %v2320
        %2732 = vmatprep.subr.bf16.mxu0 0
        %2733 = vmatpush1.bf16.msra.mxu0 %v2321
        %2734 = vmatprep.subr.bf16.mxu0 0
        %2735 = vmatpush1.bf16.msra.mxu0 %v2322
        %2736 = vmatprep.subr.bf16.mxu0 0
        %2737 = vmatpush1.bf16.msra.mxu0 %v2323
        %2738 = vmatprep.subr.bf16.mxu0 0
        %2739 = vmatpush1.bf16.msra.mxu0 %v2324
        %2740 = vmatprep.subr.bf16.mxu0 0
        %2741 = vmatpush1.bf16.msra.mxu0 %v2325
        %2742 = vmatprep.mubr.bf16.mxu0 %v1439
        %2743 = vmatmul.mubr.bf16.gmra.mrb[0].mxu0 %v1438
        %v2744 = vpop.f32.mrb[0].mxu0
        %v2745 = vadd.f32 %v2705, %v2744
        %v2746 = vpop.f32.mrb[0].mxu0
        %v2747 = vpop.f32.mrb[0].mxu0
        %v2748 = vpop.f32.mrb[0].mxu0
        %2749 = vdwg.mxu0
        %2750 = vmatprep.subr.bf16.mxu0 0
        %2751 = vmatpush1.bf16.msra.mxu0 %v2326
        %2752 = vmatprep.subr.bf16.mxu0 0
        %2753 = vmatpush1.bf16.msra.mxu0 %v2327
        %2754 = vmatprep.subr.bf16.mxu0 0
        %2755 = vmatpush1.bf16.msra.mxu0 %v2328
        %2756 = vmatprep.subr.bf16.mxu0 0
        %2757 = vmatpush1.bf16.msra.mxu0 %v2329
        %2758 = vmatprep.subr.bf16.mxu0 0
        %2759 = vmatpush1.bf16.msra.mxu0 %v2330
        %2760 = vmatprep.subr.bf16.mxu0 0
        %2761 = vmatpush1.bf16.msra.mxu0 %v2331
        %2762 = vmatprep.subr.bf16.mxu0 0
        %2763 = vmatpush1.bf16.msra.mxu0 %v2332
        %2764 = vmatprep.subr.bf16.mxu0 0
        %2765 = vmatpush1.bf16.msra.mxu0 %v2333
        %2766 = vmatprep.subr.bf16.mxu0 0
        %2767 = vmatpush1.bf16.msra.mxu0 %v2334
        %2768 = vmatprep.subr.bf16.mxu0 0
        %2769 = vmatpush1.bf16.msra.mxu0 %v2335
        %2770 = vmatprep.subr.bf16.mxu0 0
        %2771 = vmatpush1.bf16.msra.mxu0 %v2336
        %2772 = vmatprep.subr.bf16.mxu0 0
        %2773 = vmatpush1.bf16.msra.mxu0 %v2337
        %2774 = vmatprep.subr.bf16.mxu0 0
        %2775 = vmatpush1.bf16.msra.mxu0 %v2338
        %2776 = vmatprep.subr.bf16.mxu0 0
        %2777 = vmatpush1.bf16.msra.mxu0 %v2339
        %2778 = vmatprep.subr.bf16.mxu0 0
        %2779 = vmatpush1.bf16.msra.mxu0 %v2340
        %2780 = vmatprep.subr.bf16.mxu0 0
        %2781 = vmatpush1.bf16.msra.mxu0 %v2341
        %2782 = vmatprep.mubr.bf16.mxu0 %v1441
        %2783 = vmatmul.mubr.bf16.gmra.mrb[0].mxu0 %v1440
        %v2784 = vpop.f32.mrb[0].mxu0
        %v2785 = vadd.f32 %v2745, %v2784
        %v2786 = vpop.f32.mrb[0].mxu0
        %v2787 = vpop.f32.mrb[0].mxu0
        %v2788 = vpop.f32.mrb[0].mxu0
        %2789 = vdwg.mxu0
        %v2790 = vadd.f32 %v801, %v2785
        %v2791 = vsel %vm777, %v2790, 0.0
        %2792 = vadd.xlane.f32.xlu0 %v2791
        %v2793 = vpop.xlane.xlu0 %2792
        %v2794 = vmul.f32 %v2793, %v781
        %v2795 = vsub.f32 %v2790, %v2794
        %v2796 = vmul.f32 %v2795, %v2795
        %v2797 = vsel %vm777, %v2796, 0.0
        %2798 = vadd.xlane.f32.xlu0 %v2797
        %v2799 = vpop.xlane.xlu0 %2798
        %v2800 = vmul.f32 %v2799, %v781
        %v2801 = vadd.f32 %v2800, 1e-05
        %v2802 = vrsqrt.pop %v2801
        %v2803 = vmul.f32 %v2795, %v2802
        %v2804 = vlaneseq
        %v2805 = vshrl.u32 %v2804, 7
        %v2806 = vsub.s32 5, %v2805
        %v2807 = vrot.slane %v646, %v2806
        %v2808 = vmul.f32 %v2803, %v2807
        %v2809 = vlaneseq
        %v2810 = vshrl.u32 %v2809, 7
        %v2811 = vsub.s32 6, %v2810
        %v2812 = vrot.slane %v646, %v2811
        %v2813 = vadd.f32 %v2808, %v2812
        %2814 = vst.msk [vmem:[#allocation2] sm:$0x3] %vm777, %v2813
        %p2815 = scmp.eq.s32.totalorder %s24, 1
        // Predicated region
        $region73: #{tpu_custom_call.1} parent=63 // pred_check
          %p2816 = pneg %p2815
        $region74: #{tpu_custom_call.1} parent=63 // pred_check_branch
          %2818 = sbr.rel (%p2816) target = $region76
        $region75: #{tpu_custom_call.1} parent=63 // pred_region
          %v2819 = vld [vmem:[#allocation2] sm:$0x3]
          %v2820 = vpack.c.bf16 %v2819, %v2819
          %v2821 = vld [vmem:[%s10] sm:$0xf]
          %v2822 = vld [vmem:[%s10 + $0x4] sm:$0xf]
          %v2823 = vld [vmem:[%s10 + $0x8] sm:$0xf]
          %v2824 = vld [vmem:[%s10 + $0xc] sm:$0xf]
          %v2825 = vld [vmem:[%s3 + $0x1] sm:$0x1]
          %v2826 = vlaneseq
          %v2827 = vshrl.u32 %v2826, 7
          %v2828 = vsub.s32 0, %v2827
          %v2829 = vrot.slane %v2825, %v2828
          %v2834 = vunpack.c.l.b16 %v2821
          %v2835 = vunpack.c.l.b16 %v2822
          %v2836 = vunpack.c.l.b16 %v2823
          %v2837 = vunpack.c.l.b16 %v2824
          %v2838 = vpack.c.b16 %v2835, %v2834
          %v2839 = vpack.c.b16 %v2837, %v2836
          %v2843 = vsel %vm668, %v2820, 0
          %2845 = vmatprep.subr.bf16.mxu0 0
          %2846 = vmatpush1.bf16.msra.mxu0 %v2838
          %2847 = vmatprep.subr.bf16.mxu0 0
          %2848 = vmatpush1.bf16.msra.mxu0 %v2839
          %2849 = vmatprep.subr.bf16.mxu0 0
          %2850 = vmatpush1.bf16.msra.mxu0 0
          %2851 = vmatprep.subr.bf16.mxu0 0
          %2852 = vmatpush1.bf16.msra.mxu0 0
          %2853 = vmatprep.subr.bf16.mxu0 0
          %2854 = vmatpush1.bf16.msra.mxu0 0
          %2855 = vmatprep.subr.bf16.mxu0 0
          %2856 = vmatpush1.bf16.msra.mxu0 0
          %2857 = vmatprep.subr.bf16.mxu0 0
          %2858 = vmatpush1.bf16.msra.mxu0 0
          %2859 = vmatprep.subr.bf16.mxu0 0
          %2860 = vmatpush1.bf16.msra.mxu0 0
          %2861 = vmatprep.subr.bf16.mxu0 0
          %2862 = vmatpush1.bf16.msra.mxu0 0
          %2863 = vmatprep.subr.bf16.mxu0 0
          %2864 = vmatpush1.bf16.msra.mxu0 0
          %2865 = vmatprep.subr.bf16.mxu0 0
          %2866 = vmatpush1.bf16.msra.mxu0 0
          %2867 = vmatprep.subr.bf16.mxu0 0
          %2868 = vmatpush1.bf16.msra.mxu0 0
          %2869 = vmatprep.subr.bf16.mxu0 0
          %2870 = vmatpush1.bf16.msra.mxu0 0
          %2871 = vmatprep.subr.bf16.mxu0 0
          %2872 = vmatpush1.bf16.msra.mxu0 0
          %2873 = vmatprep.subr.bf16.mxu0 0
          %2874 = vmatpush1.bf16.msra.mxu0 0
          %2875 = vmatprep.subr.bf16.mxu0 0
          %2876 = vmatpush1.bf16.msra.mxu0 0
          %2877 = vmatprep.mubr.bf16.mxu0 0
          %2878 = vmatmul.mubr.bf16.gmra.mrb[0].mxu0 %v2843
          %v2879 = vpop.f32.mrb[0].mxu0
          %v2880 = vadd.f32 %v2829, %v2879
          %v2881 = vpop.f32.mrb[0].mxu0
          %v2882 = vpop.f32.mrb[0].mxu0
          %v2883 = vpop.f32.mrb[0].mxu0
          %2884 = vdwg.mxu0
          %vm2885 = vcmask 58368
          %2886 = vst.msk [vmem:[#allocation6] sm:$0x3] %vm2885, %v2880
        $region76: #{tpu_custom_call.1} parent=63 // pred_fallthru
          _
        // Predicated region
        $region77: #{tpu_custom_call.1} parent=63 // pred_check
          %p2887 = pneg %p298
        $region78: #{tpu_custom_call.1} parent=63 // pred_check_branch
          %2889 = sbr.rel (%p2887) target = $region80
        $region79: #{tpu_custom_call.1} parent=63 // pred_region
          %s2891 = ssub.s32 32, 32
          %2892 = vsyncadd [#allocation4], %s2891
          %s2894 = sshll.u32 [#allocation6], 4
          %s2895 = int_to_ptr.vmem [resolvable:$true] %s2894
          %2897 = dma.vmem_to_hbm [thread:$0]  %s2895, 32, %s11, [#allocation4]
        $region80: #{tpu_custom_call.1} parent=63 // pred_fallthru
          _
        // Predicated region
        $region81: #{tpu_custom_call.1} parent=63 // pred_check
          %p2898 = pneg %p298
        $region82: #{tpu_custom_call.1} parent=63 // pred_check_branch
          %2900 = sbr.rel (%p2898) target = $region84
        $region83: #{tpu_custom_call.1} parent=63 // pred_region
          %2901 = dma.done [#allocation4], 32
        $region84: #{tpu_custom_call.1} parent=63 // pred_fallthru
          _
      $region64: #{tpu_custom_call.1} parent=5 // pred_fallthru
        _
      %p2902 = scmp.le.s32.totalorder 2, %s19
      // Predicated region
      $region85: #{tpu_custom_call.1} parent=5 // pred_check
        %p2903 = pneg %p2902
      $region86: #{tpu_custom_call.1} parent=5 // pred_check_branch
        %2905 = sbr.rel (%p2903) target = $region88
      $region87: #{tpu_custom_call.1} parent=5 // pred_region
        %s2906 = ssub.s32 %s19, 2
      $region88: #{tpu_custom_call.1} parent=5 // pred_fallthru
        _
    $region6: #{tpu_custom_call.1} parent=1 // loop_footer
      %s23 = sadd.s32 1, %s19
    $region7: #{tpu_custom_call.1} parent=1 // loop_footer_branch
      %18 = sbr.rel target = $region3
    $region8: #{tpu_custom_call.1} parent=1 // loop_exit
      _
    %2907 = vsyncpa [#allocation4], 1
    %s2908 = scalar_lea.sflag [#allocation4], 1
    %2909 = vsyncpa %s2908, 1
    %2910 = vsyncpa [#allocation5], 1
    %s2911 = scalar_lea.sflag [#allocation5], 1
    %2912 = vsyncpa %s2911, 1

</llo_original>
